<compile_context>
chip_gen: v7x
topology: tpu7x:2x2x1
jax: 0.10.0
libtpu: 0.0.40
codegen_flags: <defaults>
</compile_context>

<pallas_src>
import functools

import jax
import jax.numpy as jnp
import numpy as np
from jax.experimental import pallas as pl
from jax.experimental.pallas import tpu as pltpu


def _bilstm_kernel(xf_ref, xb_ref, lens_ref, wif_ref, wib_ref, wrf_ref, wrb_ref,
                   bf_ref, bb_ref, out_ref,
                   gxf_ref, gxb_ref, hf_ref, cf_ref, hb_ref, cb_ref, acc_ref,
                   *, n_time_pad):
    tt = pl.program_id(1)
    n_tt = pl.num_programs(1)
    t_tile, b_tile, h4 = gxf_ref.shape
    h = h4 // 4

    # ---- init persistent state at the first time tile of each batch tile ----
    @pl.when(tt == 0)
    def _():
        hf_ref[...] = jnp.zeros_like(hf_ref)
        cf_ref[...] = jnp.zeros_like(cf_ref)
        hb_ref[...] = jnp.zeros_like(hb_ref)
        cb_ref[...] = jnp.zeros_like(cb_ref)
        acc_ref[...] = jnp.zeros_like(acc_ref)

    # ---- per-tile input projections: one MXU matmul per direction (no zero blocks) ----
    gxf_ref[...] = (
        jnp.dot(xf_ref[...], wif_ref[...], preferred_element_type=jnp.float32)
        + bf_ref[...]
    ).reshape(t_tile, b_tile, h4).astype(gxf_ref.dtype)
    gxb_ref[...] = (
        jnp.dot(xb_ref[...], wib_ref[...], preferred_element_type=jnp.float32)
        + bb_ref[...]
    ).reshape(t_tile, b_tile, h4).astype(gxb_ref.dtype)

    w_rf = wrf_ref[...]                 # [H, 4H] bf16
    w_rb = wrb_ref[...]                 # [H, 4H] bf16
    lens = lens_ref[...]                # [B, 1]  int32

    # gate columns are [i | f | g | o]; only the g block is a tanh gate
    lane = jax.lax.broadcasted_iota(jnp.int32, (b_tile, h4), 1)
    g_mask = (lane >= 2 * h) & (lane < 3 * h)

    def act(gates):
        # single EUP pass: sigmoid(x) = 0.5 * tanh(x / 2) + 0.5
        pre = jnp.where(g_mask, gates, 0.5 * gates)
        th = jnp.tanh(pre)
        return jnp.where(g_mask, th, 0.5 * th + 0.5)

    t_base = tt * t_tile

    def body(t, carry):
        h_f, c_f, h_b, c_b, acc = carry
        # per-step gate slabs: fwd in natural order, bwd from the mirrored row
        gft = gxf_ref[t].astype(jnp.float32)                  # [B, 4H]
        gbt = gxb_ref[t_tile - 1 - t].astype(jnp.float32)     # [B, 4H]

        af = act(gft + jnp.dot(h_f.astype(w_rf.dtype), w_rf,
                               preferred_element_type=jnp.float32))
        ab = act(gbt + jnp.dot(h_b.astype(w_rb.dtype), w_rb,
                               preferred_element_type=jnp.float32))

        c_f = af[:, h:2 * h] * c_f + af[:, 0:h] * af[:, 2 * h:3 * h]
        h_f = af[:, 3 * h:4 * h] * jnp.tanh(c_f)

        c_b_new = ab[:, h:2 * h] * c_b + ab[:, 0:h] * ab[:, 2 * h:3 * h]
        h_b_new = ab[:, 3 * h:4 * h] * jnp.tanh(c_b_new)

        s = t_base + t                                        # global step index
        if n_time_pad:
            # backward direction hits the zero-padded timesteps first: freeze its
            # state until it reaches the last real timestep.
            vb = (s >= n_time_pad).astype(jnp.float32)
            c_b = vb * c_b_new + (1.0 - vb) * c_b
            h_b = vb * h_b_new + (1.0 - vb) * h_b
        else:
            c_b, h_b = c_b_new, h_b_new

        # forward endpoint: accumulate h_f where t == lens - 1
        sel = (lens == s + 1).astype(jnp.float32)             # [B, 1]
        acc = acc + sel * h_f
        return h_f, c_f, h_b, c_b, acc

    init = (hf_ref[...], cf_ref[...], hb_ref[...], cb_ref[...], acc_ref[...])
    h_f, c_f, h_b, c_b, acc = jax.lax.fori_loop(
        0, t_tile, body, init, unroll=min(t_tile, 8))

    hf_ref[...] = h_f
    cf_ref[...] = c_f
    hb_ref[...] = h_b
    cb_ref[...] = c_b
    acc_ref[...] = acc

    @pl.when(tt == n_tt - 1)
    def _():
        # fwd half: accumulated hidden at t = len-1; bwd half: final backward hidden
        # (== backward output at original t = 0).  Lane-dense single store.
        out_ref[...] = jnp.concatenate([acc, h_b], axis=-1).astype(out_ref.dtype)


def _pad_gate_chunks(w, h, h_pad):
    """Pad each of the 4 gate chunks (size h along the last axis) to h_pad with zeros."""
    if h == h_pad:
        return w
    pad = [(0, 0)] * (w.ndim - 1) + [(0, h_pad - h)]
    return jnp.concatenate([jnp.pad(p, pad) for p in jnp.split(w, 4, axis=-1)],
                           axis=-1)


def bpe_timestamp_rnn(embedding_x, lens_x, params, *, t_tile=16, b_tile=8):
    """embedding_x: [B, T, D] float32 (batch_first, like the PyTorch module)."""
    x = jnp.asarray(embedding_x, jnp.float32)
    B, T, D = x.shape
    H = params["whh_f"].shape[1]
    Hp = ((H + 63) // 64) * 64          # lane-friendly hidden (no-op at production H=384)

    B_pad = ((B + b_tile - 1) // b_tile) * b_tile
    T_pad = ((T + t_tile - 1) // t_tile) * t_tile
    n_bt, n_tt = B_pad // b_tile, T_pad // t_tile
    n_time_pad = T_pad - T

    # ---- x: bf16, grouped by batch tile, time-major inside each tile; passed twice
    #      (forward tiles + mirrored backward tiles), no reversed/concatenated copy ----
    x_pad = jnp.pad(x, ((0, B_pad - B), (0, T_pad - T), (0, 0)))
    x_r = (x_pad.reshape(n_bt, b_tile, T_pad, D)
           .transpose(0, 2, 1, 3)
           .reshape(n_bt, T_pad * b_tile, D)
           .astype(jnp.bfloat16))

    lens = jnp.asarray(lens_x, jnp.int32).reshape(B)
    lens_pad = jnp.pad(lens, (0, B_pad - B)).reshape(B_pad, 1)   # padded rows: never selected

    # ---- weights: [D,4H] / [H,4H] per direction (gate chunks i,f,g,o padded to Hp) ----
    w_in_f = _pad_gate_chunks(params["wih_f"].T, H, Hp).astype(jnp.bfloat16)
    w_in_b = _pad_gate_chunks(params["wih_b"].T, H, Hp).astype(jnp.bfloat16)
    w_rec_f = jnp.pad(_pad_gate_chunks(params["whh_f"].T, H, Hp),
                      ((0, Hp - H), (0, 0))).astype(jnp.bfloat16)
    w_rec_b = jnp.pad(_pad_gate_chunks(params["whh_b"].T, H, Hp),
                      ((0, Hp - H), (0, 0))).astype(jnp.bfloat16)
    bias_f = _pad_gate_chunks((params["bih_f"] + params["bhh_f"])[None, :],
                              H, Hp).astype(jnp.float32)
    bias_b = _pad_gate_chunks((params["bih_b"] + params["bhh_b"])[None, :],
                              H, Hp).astype(jnp.float32)

    # ---- rough per-tile VMEM footprint -> explicit scoped-vmem limit ----
    est = (2 * 2 * t_tile * b_tile * D * 2                 # x tiles (2 dirs, double-buffered, bf16)
           + 2 * t_tile * b_tile * 4 * Hp * 2              # bf16 gate slabs
           + 2 * 2 * (D + Hp) * 4 * Hp * 2                 # weights
           + (5 * b_tile * Hp + 2 * b_tile * Hp + 8 * Hp + 128 * b_tile) * 4)
    vmem_limit = int(min(max(4 * est, 16 * 2 ** 20), 64 * 2 ** 20))

    grid_spec = pltpu.PrefetchScalarGridSpec(
        num_scalar_prefetch=0,
        grid=(n_bt, n_tt),
        in_specs=[
            pl.BlockSpec((None, t_tile * b_tile, D),
                         lambda b, t: (b, t, 0)),                    # x, forward tiles
            pl.BlockSpec((None, t_tile * b_tile, D),
                         lambda b, t: (b, n_tt - 1 - t, 0)),         # x, mirrored tiles (bwd)
            pl.BlockSpec((b_tile, 1), lambda b, t: (b, 0)),          # lens
            pl.BlockSpec((D, 4 * Hp), lambda b, t: (0, 0)),          # W_in fwd
            pl.BlockSpec((D, 4 * Hp), lambda b, t: (0, 0)),          # W_in bwd
            pl.BlockSpec((Hp, 4 * Hp), lambda b, t: (0, 0)),         # W_rec fwd
            pl.BlockSpec((Hp, 4 * Hp), lambda b, t: (0, 0)),         # W_rec bwd
            pl.BlockSpec((1, 4 * Hp), lambda b, t: (0, 0)),          # bias fwd
            pl.BlockSpec((1, 4 * Hp), lambda b, t: (0, 0)),          # bias bwd
        ],
        out_specs=pl.BlockSpec((b_tile, 2 * Hp), lambda b, t: (b, 0)),
        scratch_shapes=[
            pltpu.VMEM((t_tile, b_tile, 4 * Hp), jnp.bfloat16),      # gate slab fwd
            pltpu.VMEM((t_tile, b_tile, 4 * Hp), jnp.bfloat16),      # gate slab bwd
            pltpu.VMEM((b_tile, Hp), jnp.float32),                   # h fwd
            pltpu.VMEM((b_tile, Hp), jnp.float32),                   # c fwd
            pltpu.VMEM((b_tile, Hp), jnp.float32),                   # h bwd
            pltpu.VMEM((b_tile, Hp), jnp.float32),                   # c bwd
            pltpu.VMEM((b_tile, Hp), jnp.float32),                   # fwd endpoint accumulator
        ])

    out = pl.pallas_call(
        functools.partial(_bilstm_kernel, n_time_pad=n_time_pad),
        out_shape=jax.ShapeDtypeStruct((B_pad, 2 * Hp), jnp.float32),
        grid_spec=grid_spec,
        compiler_params=pltpu.CompilerParams(
            dimension_semantics=("parallel", "arbitrary"),
            vmem_limit_bytes=vmem_limit),
    )(x_r, x_r, lens_pad, w_in_f, w_in_b, w_rec_f, w_rec_b, bias_f, bias_b)

    # strip batch / hidden padding and assemble [fwd(t=len-1) | bwd(t=0)]
    return jnp.concatenate([out[:B, :H], out[:B, Hp:Hp + H]], axis=1)


def init_params(key, input_size, hidden_size):
    """Deterministic init matching PyTorch LSTM parameter shapes (bidirectional)."""
    H = hidden_size // 2
    k = 1.0 / np.sqrt(H)
    keys = jax.random.split(key, 8)
    u = lambda kk, shape: jax.random.uniform(kk, shape, jnp.float32, -k, k)
    return {
        "wih_f": u(keys[0], (4 * H, input_size)),
        "whh_f": u(keys[1], (4 * H, H)),
        "bih_f": u(keys[2], (4 * H,)),
        "bhh_f": u(keys[3], (4 * H,)),
        "wih_b": u(keys[4], (4 * H, input_size)),
        "whh_b": u(keys[5], (4 * H, H)),
        "bih_b": u(keys[6], (4 * H,)),
        "bhh_b": u(keys[7], (4 * H,)),
    }


def reference(embedding_x, lens_x, params):
    """Pure-numpy replica of the PyTorch module forward (sanity check)."""
    x = np.asarray(embedding_x, np.float32)
    B, T, D = x.shape
    p = {k: np.asarray(v, np.float32) for k, v in params.items()}
    H = p["whh_f"].shape[1]

    def run(xs, wih, whh, bih, bhh):
        h = np.zeros((B, H), np.float32)
        c = np.zeros((B, H), np.float32)
        outs = []
        for t in range(xs.shape[1]):
            gates = xs[:, t] @ wih.T + bih + h @ whh.T + bhh
            i = 1.0 / (1.0 + np.exp(-gates[:, 0:H]))
            f = 1.0 / (1.0 + np.exp(-gates[:, H:2 * H]))
            g = np.tanh(gates[:, 2 * H:3 * H])
            o = 1.0 / (1.0 + np.exp(-gates[:, 3 * H:4 * H]))
            c = f * c + i * g
            h = o * np.tanh(c)
            outs.append(h)
        return np.stack(outs, axis=1)  # [B, T, H]

    out_f = run(x, p["wih_f"], p["whh_f"], p["bih_f"], p["bhh_f"])
    out_b = run(x[:, ::-1], p["wih_b"], p["whh_b"], p["bih_b"], p["bhh_b"])[:, ::-1]
    lens = np.asarray(lens_x)
    fwd = out_f[np.arange(B), lens - 1]
    bwd = out_b[:, 0]
    return np.concatenate([fwd, bwd], axis=1)


if __name__ == "__main__":
    key = jax.random.PRNGKey(0)

    def run_case(case_key, B, T, D, hidden_size, lens_x, t_tile):
        kx, kp = jax.random.split(case_key)
        x = jax.random.normal(kx, (B, T, D), jnp.float32)
        params = init_params(kp, D, hidden_size)
        out = jax.block_until_ready(
            bpe_timestamp_rnn(x, lens_x, params, t_tile=t_tile))
        ref = reference(np.asarray(x), lens_x, params)
        # tolerance reflects bf16 MXU operands / bf16 gate slab with f32 accumulation
        np.testing.assert_allclose(np.asarray(out), ref, atol=3e-2, rtol=3e-2)

    k1, k2 = jax.random.split(key)
    # primary small config consistent with the module (input=hidden=32 -> per-dir H=16),
    # exercises two time tiles + mirrored backward tiles.
    run_case(k1, B=2, T=8, D=32, hidden_size=32, lens_x=[8, 5], t_tile=4)
    # exercises batch tiling (2 tiles), time padding (T=7 -> 9) with backward masking.
    run_case(k2, B=9, T=7, D=32, hidden_size=32,
             lens_x=[7, 1, 3, 5, 2, 6, 4, 7, 3], t_tile=3)

    print("KERNEL_OK")
</pallas_src>

<mosaic_0001>
module attributes {stable_mosaic.version = 11 : i64} {
  func.func @_bilstm_kernel(%arg0: i32, %arg1: i32, %arg2: memref<1x32x32xbf16, #tpu.memory_space<vmem>>, %arg3: memref<1x32x32xbf16, #tpu.memory_space<vmem>>, %arg4: memref<8x1xi32, #tpu.memory_space<vmem>>, %arg5: memref<32x256xbf16, #tpu.memory_space<vmem>>, %arg6: memref<32x256xbf16, #tpu.memory_space<vmem>>, %arg7: memref<64x256xbf16, #tpu.memory_space<vmem>>, %arg8: memref<64x256xbf16, #tpu.memory_space<vmem>>, %arg9: memref<1x256xf32, #tpu.memory_space<vmem>>, %arg10: memref<1x256xf32, #tpu.memory_space<vmem>>, %arg11: memref<8x128xf32, #tpu.memory_space<vmem>>, %arg12: memref<4x8x256xbf16, #tpu.memory_space<vmem>>, %arg13: memref<4x8x256xbf16, #tpu.memory_space<vmem>>, %arg14: memref<8x64xf32, #tpu.memory_space<vmem>>, %arg15: memref<8x64xf32, #tpu.memory_space<vmem>>, %arg16: memref<8x64xf32, #tpu.memory_space<vmem>>, %arg17: memref<8x64xf32, #tpu.memory_space<vmem>>, %arg18: memref<8x64xf32, #tpu.memory_space<vmem>>) attributes {dimension_semantics = [#tpu.dimension_semantics<parallel>, #tpu.dimension_semantics<arbitrary>], iteration_bounds = array<i64: 1, 2>, scalar_prefetch = 0 : i64, scratch_operands = 7 : i64, tpu.core_type = #tpu.core_type<tc>, window_params = [{transform_indices = @transform_0, window_bounds = array<i64: 1, 32, 32>}, {transform_indices = @transform_1, window_bounds = array<i64: 1, 32, 32>}, {transform_indices = @transform_2, window_bounds = array<i64: 8, 1>}, {pipeline_mode = #tpu.pipeline_mode<synchronous>, transform_indices = @transform_3, window_bounds = array<i64: 32, 256>}, {pipeline_mode = #tpu.pipeline_mode<synchronous>, transform_indices = @transform_4, window_bounds = array<i64: 32, 256>}, {pipeline_mode = #tpu.pipeline_mode<synchronous>, transform_indices = @transform_5, window_bounds = array<i64: 64, 256>}, {pipeline_mode = #tpu.pipeline_mode<synchronous>, transform_indices = @transform_6, window_bounds = array<i64: 64, 256>}, {pipeline_mode = #tpu.pipeline_mode<synchronous>, transform_indices = @transform_7, window_bounds = array<i64: 1, 256>}, {pipeline_mode = #tpu.pipeline_mode<synchronous>, transform_indices = @transform_8, window_bounds = array<i64: 1, 256>}, {transform_indices = @transform_9, window_bounds = array<i64: 8, 128>}]} {
    %c0_i32 = arith.constant 0 : i32
    %0 = arith.cmpi eq, %arg1, %c0_i32 : i32
    %1 = arith.extui %0 : i1 to i32
    %c0_i32_0 = arith.constant 0 : i32
    %2 = arith.cmpi ne, %1, %c0_i32_0 : i32
    scf.if %2 {
      %cst_107 = arith.constant 0.000000e+00 : f32
      %286 = vector.broadcast %cst_107 : f32 to vector<8x64xf32>
      %c0_108 = arith.constant 0 : index
      %c0_109 = arith.constant 0 : index
      %287 = vector.load %arg14[%c0_108, %c0_109] : memref<8x64xf32, #tpu.memory_space<vmem>>, vector<8x64xf32>
      tpu.vector_store %arg14[%c0_108, %c0_109], %286 {strides = array<i32>} : memref<8x64xf32, #tpu.memory_space<vmem>>, vector<8x64xf32>,
      %cst_110 = arith.constant 0.000000e+00 : f32
      %288 = vector.broadcast %cst_110 : f32 to vector<8x64xf32>
      %c0_111 = arith.constant 0 : index
      %c0_112 = arith.constant 0 : index
      %289 = vector.load %arg15[%c0_111, %c0_112] : memref<8x64xf32, #tpu.memory_space<vmem>>, vector<8x64xf32>
      tpu.vector_store %arg15[%c0_111, %c0_112], %288 {strides = array<i32>} : memref<8x64xf32, #tpu.memory_space<vmem>>, vector<8x64xf32>,
      %cst_113 = arith.constant 0.000000e+00 : f32
      %290 = vector.broadcast %cst_113 : f32 to vector<8x64xf32>
      %c0_114 = arith.constant 0 : index
      %c0_115 = arith.constant 0 : index
      %291 = vector.load %arg16[%c0_114, %c0_115] : memref<8x64xf32, #tpu.memory_space<vmem>>, vector<8x64xf32>
      tpu.vector_store %arg16[%c0_114, %c0_115], %290 {strides = array<i32>} : memref<8x64xf32, #tpu.memory_space<vmem>>, vector<8x64xf32>,
      %cst_116 = arith.constant 0.000000e+00 : f32
      %292 = vector.broadcast %cst_116 : f32 to vector<8x64xf32>
      %c0_117 = arith.constant 0 : index
      %c0_118 = arith.constant 0 : index
      %293 = vector.load %arg17[%c0_117, %c0_118] : memref<8x64xf32, #tpu.memory_space<vmem>>, vector<8x64xf32>
      tpu.vector_store %arg17[%c0_117, %c0_118], %292 {strides = array<i32>} : memref<8x64xf32, #tpu.memory_space<vmem>>, vector<8x64xf32>,
      %cst_119 = arith.constant 0.000000e+00 : f32
      %294 = vector.broadcast %cst_119 : f32 to vector<8x64xf32>
      %c0_120 = arith.constant 0 : index
      %c0_121 = arith.constant 0 : index
      %295 = vector.load %arg18[%c0_120, %c0_121] : memref<8x64xf32, #tpu.memory_space<vmem>>, vector<8x64xf32>
      tpu.vector_store %arg18[%c0_120, %c0_121], %294 {strides = array<i32>} : memref<8x64xf32, #tpu.memory_space<vmem>>, vector<8x64xf32>,
    } else {
    }
    %c0 = arith.constant 0 : index
    %c0_1 = arith.constant 0 : index
    %c0_2 = arith.constant 0 : index
    %3 = vector.load %arg2[%c0, %c0_1, %c0_2] : memref<1x32x32xbf16, #tpu.memory_space<vmem>>, vector<1x32x32xbf16>
    %4 = vector.shape_cast %3 : vector<1x32x32xbf16> to vector<32x32xbf16>
    %c0_3 = arith.constant 0 : index
    %c0_4 = arith.constant 0 : index
    %5 = vector.load %arg5[%c0_3, %c0_4] : memref<32x256xbf16, #tpu.memory_space<vmem>>, vector<32x256xbf16>
    %cst = arith.constant dense<0.000000e+00> : vector<32x256xf32>
    %6 = tpu.matmul %4, %5, %cst {dimension_numbers = #tpu.dot_dimension_numbers<[1], [0], [0], [1], [0, 0, 1, 1], [], []>} : vector<32x32xbf16>, vector<32x256xbf16>, vector<32x256xf32> -> vector<32x256xf32>
    %c0_5 = arith.constant 0 : index
    %c0_6 = arith.constant 0 : index
    %7 = vector.load %arg9[%c0_5, %c0_6] : memref<1x256xf32, #tpu.memory_space<vmem>>, vector<1x256xf32>
    %8 = vector.broadcast %7 : vector<1x256xf32> to vector<32x256xf32>
    %9 = arith.addf %6, %8 : vector<32x256xf32>
    %10 = vector.shape_cast %9 : vector<32x256xf32> to vector<4x8x256xf32>
    %11 = arith.truncf %10 : vector<4x8x256xf32> to vector<4x8x256xbf16>
    %c0_7 = arith.constant 0 : index
    %c0_8 = arith.constant 0 : index
    %c0_9 = arith.constant 0 : index
    %12 = vector.load %arg12[%c0_7, %c0_8, %c0_9] : memref<4x8x256xbf16, #tpu.memory_space<vmem>>, vector<4x8x256xbf16>
    tpu.vector_store %arg12[%c0_7, %c0_8, %c0_9], %11 {strides = array<i32>} : memref<4x8x256xbf16, #tpu.memory_space<vmem>>, vector<4x8x256xbf16>,
    %c0_10 = arith.constant 0 : index
    %c0_11 = arith.constant 0 : index
    %c0_12 = arith.constant 0 : index
    %13 = vector.load %arg3[%c0_10, %c0_11, %c0_12] : memref<1x32x32xbf16, #tpu.memory_space<vmem>>, vector<1x32x32xbf16>
    %14 = vector.shape_cast %13 : vector<1x32x32xbf16> to vector<32x32xbf16>
    %c0_13 = arith.constant 0 : index
    %c0_14 = arith.constant 0 : index
    %15 = vector.load %arg6[%c0_13, %c0_14] : memref<32x256xbf16, #tpu.memory_space<vmem>>, vector<32x256xbf16>
    %cst_15 = arith.constant dense<0.000000e+00> : vector<32x256xf32>
    %16 = tpu.matmul %14, %15, %cst_15 {dimension_numbers = #tpu.dot_dimension_numbers<[1], [0], [0], [1], [0, 0, 1, 1], [], []>} : vector<32x32xbf16>, vector<32x256xbf16>, vector<32x256xf32> -> vector<32x256xf32>
    %c0_16 = arith.constant 0 : index
    %c0_17 = arith.constant 0 : index
    %17 = vector.load %arg10[%c0_16, %c0_17] : memref<1x256xf32, #tpu.memory_space<vmem>>, vector<1x256xf32>
    %18 = vector.broadcast %17 : vector<1x256xf32> to vector<32x256xf32>
    %19 = arith.addf %16, %18 : vector<32x256xf32>
    %20 = vector.shape_cast %19 : vector<32x256xf32> to vector<4x8x256xf32>
    %21 = arith.truncf %20 : vector<4x8x256xf32> to vector<4x8x256xbf16>
    %c0_18 = arith.constant 0 : index
    %c0_19 = arith.constant 0 : index
    %c0_20 = arith.constant 0 : index
    %22 = vector.load %arg13[%c0_18, %c0_19, %c0_20] : memref<4x8x256xbf16, #tpu.memory_space<vmem>>, vector<4x8x256xbf16>
    tpu.vector_store %arg13[%c0_18, %c0_19, %c0_20], %21 {strides = array<i32>} : memref<4x8x256xbf16, #tpu.memory_space<vmem>>, vector<4x8x256xbf16>,
    %c0_21 = arith.constant 0 : index
    %c0_22 = arith.constant 0 : index
    %23 = vector.load %arg7[%c0_21, %c0_22] : memref<64x256xbf16, #tpu.memory_space<vmem>>, vector<64x256xbf16>
    %c0_23 = arith.constant 0 : index
    %c0_24 = arith.constant 0 : index
    %24 = vector.load %arg8[%c0_23, %c0_24] : memref<64x256xbf16, #tpu.memory_space<vmem>>, vector<64x256xbf16>
    %c0_25 = arith.constant 0 : index
    %c0_26 = arith.constant 0 : index
    %25 = vector.load %arg4[%c0_25, %c0_26] : memref<8x1xi32, #tpu.memory_space<vmem>>, vector<8x1xi32>
    %26 = tpu.iota {dimensions = array<i32: 1>} : vector<8x256xi32>
    %c128_i32 = arith.constant 128 : i32
    %27 = vector.broadcast %c128_i32 : i32 to vector<8x256xi32>
    %28 = arith.cmpi sge, %26, %27 : vector<8x256xi32>
    %c192_i32 = arith.constant 192 : i32
    %29 = vector.broadcast %c192_i32 : i32 to vector<8x256xi32>
    %30 = arith.cmpi slt, %26, %29 : vector<8x256xi32>
    %31 = arith.andi %28, %30 : vector<8x256xi1>
    %c4_i32 = arith.constant 4 : i32
    %32 = arith.muli %arg1, %c4_i32 : i32
    %c0_27 = arith.constant 0 : index
    %c0_28 = arith.constant 0 : index
    %33 = vector.load %arg14[%c0_27, %c0_28] : memref<8x64xf32, #tpu.memory_space<vmem>>, vector<8x64xf32>
    %c0_29 = arith.constant 0 : index
    %c0_30 = arith.constant 0 : index
    %34 = vector.load %arg15[%c0_29, %c0_30] : memref<8x64xf32, #tpu.memory_space<vmem>>, vector<8x64xf32>
    %c0_31 = arith.constant 0 : index
    %c0_32 = arith.constant 0 : index
    %35 = vector.load %arg16[%c0_31, %c0_32] : memref<8x64xf32, #tpu.memory_space<vmem>>, vector<8x64xf32>
    %c0_33 = arith.constant 0 : index
    %c0_34 = arith.constant 0 : index
    %36 = vector.load %arg17[%c0_33, %c0_34] : memref<8x64xf32, #tpu.memory_space<vmem>>, vector<8x64xf32>
    %c0_35 = arith.constant 0 : index
    %c0_36 = arith.constant 0 : index
    %37 = vector.load %arg18[%c0_35, %c0_36] : memref<8x64xf32, #tpu.memory_space<vmem>>, vector<8x64xf32>
    %c0_i32_37 = arith.constant 0 : i32
    %38 = arith.index_cast %c0_i32_37 : i32 to index
    %c0_38 = arith.constant 0 : index
    %c0_39 = arith.constant 0 : index
    %39 = vector.load %arg12[%38, %c0_38, %c0_39] : memref<4x8x256xbf16, #tpu.memory_space<vmem>>, vector<1x8x256xbf16>
    %40 = vector.shape_cast %39 : vector<1x8x256xbf16> to vector<8x256xbf16>
    %41 = arith.extf %40 : vector<8x256xbf16> to vector<8x256xf32>
    %c3_i32 = arith.constant 3 : i32
    %42 = arith.subi %c3_i32, %c0_i32_37 : i32
    %43 = arith.index_cast %42 : i32 to index
    %c0_40 = arith.constant 0 : index
    %c0_41 = arith.constant 0 : index
    %44 = vector.load %arg13[%43, %c0_40, %c0_41] : memref<4x8x256xbf16, #tpu.memory_space<vmem>>, vector<1x8x256xbf16>
    %45 = vector.shape_cast %44 : vector<1x8x256xbf16> to vector<8x256xbf16>
    %46 = arith.extf %45 : vector<8x256xbf16> to vector<8x256xf32>
    %47 = arith.truncf %33 : vector<8x64xf32> to vector<8x64xbf16>
    %cst_42 = arith.constant dense<0.000000e+00> : vector<8x256xf32>
    %48 = tpu.matmul %47, %23, %cst_42 {dimension_numbers = #tpu.dot_dimension_numbers<[1], [0], [0], [1], [0, 0, 1, 1], [], []>} : vector<8x64xbf16>, vector<64x256xbf16>, vector<8x256xf32> -> vector<8x256xf32>
    %49 = arith.addf %41, %48 : vector<8x256xf32>
    %cst_43 = arith.constant 5.000000e-01 : f32
    %50 = vector.broadcast %cst_43 : f32 to vector<8x256xf32>
    %51 = arith.mulf %50, %49 : vector<8x256xf32>
    %52 = arith.select %31, %49, %51 : vector<8x256xi1>, vector<8x256xf32>
    %53 = math.tanh %52 : vector<8x256xf32>
    %cst_44 = arith.constant 5.000000e-01 : f32
    %54 = vector.broadcast %cst_44 : f32 to vector<8x256xf32>
    %55 = arith.mulf %54, %53 : vector<8x256xf32>
    %cst_45 = arith.constant 5.000000e-01 : f32
    %56 = vector.broadcast %cst_45 : f32 to vector<8x256xf32>
    %57 = arith.addf %55, %56 : vector<8x256xf32>
    %58 = arith.select %31, %53, %57 : vector<8x256xi1>, vector<8x256xf32>
    %59 = arith.truncf %35 : vector<8x64xf32> to vector<8x64xbf16>
    %cst_46 = arith.constant dense<0.000000e+00> : vector<8x256xf32>
    %60 = tpu.matmul %59, %24, %cst_46 {dimension_numbers = #tpu.dot_dimension_numbers<[1], [0], [0], [1], [0, 0, 1, 1], [], []>} : vector<8x64xbf16>, vector<64x256xbf16>, vector<8x256xf32> -> vector<8x256xf32>
    %61 = arith.addf %46, %60 : vector<8x256xf32>
    %cst_47 = arith.constant 5.000000e-01 : f32
    %62 = vector.broadcast %cst_47 : f32 to vector<8x256xf32>
    %63 = arith.mulf %62, %61 : vector<8x256xf32>
    %64 = arith.select %31, %61, %63 : vector<8x256xi1>, vector<8x256xf32>
    %65 = math.tanh %64 : vector<8x256xf32>
    %cst_48 = arith.constant 5.000000e-01 : f32
    %66 = vector.broadcast %cst_48 : f32 to vector<8x256xf32>
    %67 = arith.mulf %66, %65 : vector<8x256xf32>
    %cst_49 = arith.constant 5.000000e-01 : f32
    %68 = vector.broadcast %cst_49 : f32 to vector<8x256xf32>
    %69 = arith.addf %67, %68 : vector<8x256xf32>
    %70 = arith.select %31, %65, %69 : vector<8x256xi1>, vector<8x256xf32>
    %71 = vector.extract_strided_slice %58 {offsets = [0, 64], sizes = [8, 64], strides = [1, 1]} : vector<8x256xf32> to vector<8x64xf32>
    %72 = arith.mulf %71, %34 : vector<8x64xf32>
    %73 = vector.extract_strided_slice %58 {offsets = [0, 0], sizes = [8, 64], strides = [1, 1]} : vector<8x256xf32> to vector<8x64xf32>
    %74 = vector.extract_strided_slice %58 {offsets = [0, 128], sizes = [8, 64], strides = [1, 1]} : vector<8x256xf32> to vector<8x64xf32>
    %75 = arith.mulf %73, %74 : vector<8x64xf32>
    %76 = arith.addf %72, %75 : vector<8x64xf32>
    %77 = vector.extract_strided_slice %58 {offsets = [0, 192], sizes = [8, 64], strides = [1, 1]} : vector<8x256xf32> to vector<8x64xf32>
    %78 = math.tanh %76 : vector<8x64xf32>
    %79 = arith.mulf %77, %78 : vector<8x64xf32>
    %80 = vector.extract_strided_slice %70 {offsets = [0, 64], sizes = [8, 64], strides = [1, 1]} : vector<8x256xf32> to vector<8x64xf32>
    %81 = arith.mulf %80, %36 : vector<8x64xf32>
    %82 = vector.extract_strided_slice %70 {offsets = [0, 0], sizes = [8, 64], strides = [1, 1]} : vector<8x256xf32> to vector<8x64xf32>
    %83 = vector.extract_strided_slice %70 {offsets = [0, 128], sizes = [8, 64], strides = [1, 1]} : vector<8x256xf32> to vector<8x64xf32>
    %84 = arith.mulf %82, %83 : vector<8x64xf32>
    %85 = arith.addf %81, %84 : vector<8x64xf32>
    %86 = vector.extract_strided_slice %70 {offsets = [0, 192], sizes = [8, 64], strides = [1, 1]} : vector<8x256xf32> to vector<8x64xf32>
    %87 = math.tanh %85 : vector<8x64xf32>
    %88 = arith.mulf %86, %87 : vector<8x64xf32>
    %89 = arith.addi %32, %c0_i32_37 : i32
    %c1_i32 = arith.constant 1 : i32
    %90 = arith.addi %89, %c1_i32 : i32
    %91 = vector.broadcast %90 : i32 to vector<8x1xi32>
    %92 = arith.cmpi eq, %25, %91 : vector<8x1xi32>
    %93 = arith.extui %92 : vector<8x1xi1> to vector<8x1xi32>
    %94 = arith.sitofp %93 : vector<8x1xi32> to vector<8x1xf32>
    %95 = vector.broadcast %94 : vector<8x1xf32> to vector<8x64xf32>
    %96 = arith.mulf %95, %79 : vector<8x64xf32>
    %97 = arith.addf %37, %96 : vector<8x64xf32>
    %c1_i32_50 = arith.constant 1 : i32
    %98 = arith.index_cast %c1_i32_50 : i32 to index
    %c0_51 = arith.constant 0 : index
    %c0_52 = arith.constant 0 : index
    %99 = vector.load %arg12[%98, %c0_51, %c0_52] : memref<4x8x256xbf16, #tpu.memory_space<vmem>>, vector<1x8x256xbf16>
    %100 = vector.shape_cast %99 : vector<1x8x256xbf16> to vector<8x256xbf16>
    %101 = arith.extf %100 : vector<8x256xbf16> to vector<8x256xf32>
    %c3_i32_53 = arith.constant 3 : i32
    %102 = arith.subi %c3_i32_53, %c1_i32_50 : i32
    %103 = arith.index_cast %102 : i32 to index
    %c0_54 = arith.constant 0 : index
    %c0_55 = arith.constant 0 : index
    %104 = vector.load %arg13[%103, %c0_54, %c0_55] : memref<4x8x256xbf16, #tpu.memory_space<vmem>>, vector<1x8x256xbf16>
    %105 = vector.shape_cast %104 : vector<1x8x256xbf16> to vector<8x256xbf16>
    %106 = arith.extf %105 : vector<8x256xbf16> to vector<8x256xf32>
    %107 = arith.truncf %79 : vector<8x64xf32> to vector<8x64xbf16>
    %cst_56 = arith.constant dense<0.000000e+00> : vector<8x256xf32>
    %108 = tpu.matmul %107, %23, %cst_56 {dimension_numbers = #tpu.dot_dimension_numbers<[1], [0], [0], [1], [0, 0, 1, 1], [], []>} : vector<8x64xbf16>, vector<64x256xbf16>, vector<8x256xf32> -> vector<8x256xf32>
    %109 = arith.addf %101, %108 : vector<8x256xf32>
    %cst_57 = arith.constant 5.000000e-01 : f32
    %110 = vector.broadcast %cst_57 : f32 to vector<8x256xf32>
    %111 = arith.mulf %110, %109 : vector<8x256xf32>
    %112 = arith.select %31, %109, %111 : vector<8x256xi1>, vector<8x256xf32>
    %113 = math.tanh %112 : vector<8x256xf32>
    %cst_58 = arith.constant 5.000000e-01 : f32
    %114 = vector.broadcast %cst_58 : f32 to vector<8x256xf32>
    %115 = arith.mulf %114, %113 : vector<8x256xf32>
    %cst_59 = arith.constant 5.000000e-01 : f32
    %116 = vector.broadcast %cst_59 : f32 to vector<8x256xf32>
    %117 = arith.addf %115, %116 : vector<8x256xf32>
    %118 = arith.select %31, %113, %117 : vector<8x256xi1>, vector<8x256xf32>
    %119 = arith.truncf %88 : vector<8x64xf32> to vector<8x64xbf16>
    %cst_60 = arith.constant dense<0.000000e+00> : vector<8x256xf32>
    %120 = tpu.matmul %119, %24, %cst_60 {dimension_numbers = #tpu.dot_dimension_numbers<[1], [0], [0], [1], [0, 0, 1, 1], [], []>} : vector<8x64xbf16>, vector<64x256xbf16>, vector<8x256xf32> -> vector<8x256xf32>
    %121 = arith.addf %106, %120 : vector<8x256xf32>
    %cst_61 = arith.constant 5.000000e-01 : f32
    %122 = vector.broadcast %cst_61 : f32 to vector<8x256xf32>
    %123 = arith.mulf %122, %121 : vector<8x256xf32>
    %124 = arith.select %31, %121, %123 : vector<8x256xi1>, vector<8x256xf32>
    %125 = math.tanh %124 : vector<8x256xf32>
    %cst_62 = arith.constant 5.000000e-01 : f32
    %126 = vector.broadcast %cst_62 : f32 to vector<8x256xf32>
    %127 = arith.mulf %126, %125 : vector<8x256xf32>
    %cst_63 = arith.constant 5.000000e-01 : f32
    %128 = vector.broadcast %cst_63 : f32 to vector<8x256xf32>
    %129 = arith.addf %127, %128 : vector<8x256xf32>
    %130 = arith.select %31, %125, %129 : vector<8x256xi1>, vector<8x256xf32>
    %131 = vector.extract_strided_slice %118 {offsets = [0, 64], sizes = [8, 64], strides = [1, 1]} : vector<8x256xf32> to vector<8x64xf32>
    %132 = arith.mulf %131, %76 : vector<8x64xf32>
    %133 = vector.extract_strided_slice %118 {offsets = [0, 0], sizes = [8, 64], strides = [1, 1]} : vector<8x256xf32> to vector<8x64xf32>
    %134 = vector.extract_strided_slice %118 {offsets = [0, 128], sizes = [8, 64], strides = [1, 1]} : vector<8x256xf32> to vector<8x64xf32>
    %135 = arith.mulf %133, %134 : vector<8x64xf32>
    %136 = arith.addf %132, %135 : vector<8x64xf32>
    %137 = vector.extract_strided_slice %118 {offsets = [0, 192], sizes = [8, 64], strides = [1, 1]} : vector<8x256xf32> to vector<8x64xf32>
    %138 = math.tanh %136 : vector<8x64xf32>
    %139 = arith.mulf %137, %138 : vector<8x64xf32>
    %140 = vector.extract_strided_slice %130 {offsets = [0, 64], sizes = [8, 64], strides = [1, 1]} : vector<8x256xf32> to vector<8x64xf32>
    %141 = arith.mulf %140, %85 : vector<8x64xf32>
    %142 = vector.extract_strided_slice %130 {offsets = [0, 0], sizes = [8, 64], strides = [1, 1]} : vector<8x256xf32> to vector<8x64xf32>
    %143 = vector.extract_strided_slice %130 {offsets = [0, 128], sizes = [8, 64], strides = [1, 1]} : vector<8x256xf32> to vector<8x64xf32>
    %144 = arith.mulf %142, %143 : vector<8x64xf32>
    %145 = arith.addf %141, %144 : vector<8x64xf32>
    %146 = vector.extract_strided_slice %130 {offsets = [0, 192], sizes = [8, 64], strides = [1, 1]} : vector<8x256xf32> to vector<8x64xf32>
    %147 = math.tanh %145 : vector<8x64xf32>
    %148 = arith.mulf %146, %147 : vector<8x64xf32>
    %149 = arith.addi %32, %c1_i32_50 : i32
    %c1_i32_64 = arith.constant 1 : i32
    %150 = arith.addi %149, %c1_i32_64 : i32
    %151 = vector.broadcast %150 : i32 to vector<8x1xi32>
    %152 = arith.cmpi eq, %25, %151 : vector<8x1xi32>
    %153 = arith.extui %152 : vector<8x1xi1> to vector<8x1xi32>
    %154 = arith.sitofp %153 : vector<8x1xi32> to vector<8x1xf32>
    %155 = vector.broadcast %154 : vector<8x1xf32> to vector<8x64xf32>
    %156 = arith.mulf %155, %139 : vector<8x64xf32>
    %157 = arith.addf %97, %156 : vector<8x64xf32>
    %c2_i32 = arith.constant 2 : i32
    %158 = arith.index_cast %c2_i32 : i32 to index
    %c0_65 = arith.constant 0 : index
    %c0_66 = arith.constant 0 : index
    %159 = vector.load %arg12[%158, %c0_65, %c0_66] : memref<4x8x256xbf16, #tpu.memory_space<vmem>>, vector<1x8x256xbf16>
    %160 = vector.shape_cast %159 : vector<1x8x256xbf16> to vector<8x256xbf16>
    %161 = arith.extf %160 : vector<8x256xbf16> to vector<8x256xf32>
    %c3_i32_67 = arith.constant 3 : i32
    %162 = arith.subi %c3_i32_67, %c2_i32 : i32
    %163 = arith.index_cast %162 : i32 to index
    %c0_68 = arith.constant 0 : index
    %c0_69 = arith.constant 0 : index
    %164 = vector.load %arg13[%163, %c0_68, %c0_69] : memref<4x8x256xbf16, #tpu.memory_space<vmem>>, vector<1x8x256xbf16>
    %165 = vector.shape_cast %164 : vector<1x8x256xbf16> to vector<8x256xbf16>
    %166 = arith.extf %165 : vector<8x256xbf16> to vector<8x256xf32>
    %167 = arith.truncf %139 : vector<8x64xf32> to vector<8x64xbf16>
    %cst_70 = arith.constant dense<0.000000e+00> : vector<8x256xf32>
    %168 = tpu.matmul %167, %23, %cst_70 {dimension_numbers = #tpu.dot_dimension_numbers<[1], [0], [0], [1], [0, 0, 1, 1], [], []>} : vector<8x64xbf16>, vector<64x256xbf16>, vector<8x256xf32> -> vector<8x256xf32>
    %169 = arith.addf %161, %168 : vector<8x256xf32>
    %cst_71 = arith.constant 5.000000e-01 : f32
    %170 = vector.broadcast %cst_71 : f32 to vector<8x256xf32>
    %171 = arith.mulf %170, %169 : vector<8x256xf32>
    %172 = arith.select %31, %169, %171 : vector<8x256xi1>, vector<8x256xf32>
    %173 = math.tanh %172 : vector<8x256xf32>
    %cst_72 = arith.constant 5.000000e-01 : f32
    %174 = vector.broadcast %cst_72 : f32 to vector<8x256xf32>
    %175 = arith.mulf %174, %173 : vector<8x256xf32>
    %cst_73 = arith.constant 5.000000e-01 : f32
    %176 = vector.broadcast %cst_73 : f32 to vector<8x256xf32>
    %177 = arith.addf %175, %176 : vector<8x256xf32>
    %178 = arith.select %31, %173, %177 : vector<8x256xi1>, vector<8x256xf32>
    %179 = arith.truncf %148 : vector<8x64xf32> to vector<8x64xbf16>
    %cst_74 = arith.constant dense<0.000000e+00> : vector<8x256xf32>
    %180 = tpu.matmul %179, %24, %cst_74 {dimension_numbers = #tpu.dot_dimension_numbers<[1], [0], [0], [1], [0, 0, 1, 1], [], []>} : vector<8x64xbf16>, vector<64x256xbf16>, vector<8x256xf32> -> vector<8x256xf32>
    %181 = arith.addf %166, %180 : vector<8x256xf32>
    %cst_75 = arith.constant 5.000000e-01 : f32
    %182 = vector.broadcast %cst_75 : f32 to vector<8x256xf32>
    %183 = arith.mulf %182, %181 : vector<8x256xf32>
    %184 = arith.select %31, %181, %183 : vector<8x256xi1>, vector<8x256xf32>
    %185 = math.tanh %184 : vector<8x256xf32>
    %cst_76 = arith.constant 5.000000e-01 : f32
    %186 = vector.broadcast %cst_76 : f32 to vector<8x256xf32>
    %187 = arith.mulf %186, %185 : vector<8x256xf32>
    %cst_77 = arith.constant 5.000000e-01 : f32
    %188 = vector.broadcast %cst_77 : f32 to vector<8x256xf32>
    %189 = arith.addf %187, %188 : vector<8x256xf32>
    %190 = arith.select %31, %185, %189 : vector<8x256xi1>, vector<8x256xf32>
    %191 = vector.extract_strided_slice %178 {offsets = [0, 64], sizes = [8, 64], strides = [1, 1]} : vector<8x256xf32> to vector<8x64xf32>
    %192 = arith.mulf %191, %136 : vector<8x64xf32>
    %193 = vector.extract_strided_slice %178 {offsets = [0, 0], sizes = [8, 64], strides = [1, 1]} : vector<8x256xf32> to vector<8x64xf32>
    %194 = vector.extract_strided_slice %178 {offsets = [0, 128], sizes = [8, 64], strides = [1, 1]} : vector<8x256xf32> to vector<8x64xf32>
    %195 = arith.mulf %193, %194 : vector<8x64xf32>
    %196 = arith.addf %192, %195 : vector<8x64xf32>
    %197 = vector.extract_strided_slice %178 {offsets = [0, 192], sizes = [8, 64], strides = [1, 1]} : vector<8x256xf32> to vector<8x64xf32>
    %198 = math.tanh %196 : vector<8x64xf32>
    %199 = arith.mulf %197, %198 : vector<8x64xf32>
    %200 = vector.extract_strided_slice %190 {offsets = [0, 64], sizes = [8, 64], strides = [1, 1]} : vector<8x256xf32> to vector<8x64xf32>
    %201 = arith.mulf %200, %145 : vector<8x64xf32>
    %202 = vector.extract_strided_slice %190 {offsets = [0, 0], sizes = [8, 64], strides = [1, 1]} : vector<8x256xf32> to vector<8x64xf32>
    %203 = vector.extract_strided_slice %190 {offsets = [0, 128], sizes = [8, 64], strides = [1, 1]} : vector<8x256xf32> to vector<8x64xf32>
    %204 = arith.mulf %202, %203 : vector<8x64xf32>
    %205 = arith.addf %201, %204 : vector<8x64xf32>
    %206 = vector.extract_strided_slice %190 {offsets = [0, 192], sizes = [8, 64], strides = [1, 1]} : vector<8x256xf32> to vector<8x64xf32>
    %207 = math.tanh %205 : vector<8x64xf32>
    %208 = arith.mulf %206, %207 : vector<8x64xf32>
    %209 = arith.addi %32, %c2_i32 : i32
    %c1_i32_78 = arith.constant 1 : i32
    %210 = arith.addi %209, %c1_i32_78 : i32
    %211 = vector.broadcast %210 : i32 to vector<8x1xi32>
    %212 = arith.cmpi eq, %25, %211 : vector<8x1xi32>
    %213 = arith.extui %212 : vector<8x1xi1> to vector<8x1xi32>
    %214 = arith.sitofp %213 : vector<8x1xi32> to vector<8x1xf32>
    %215 = vector.broadcast %214 : vector<8x1xf32> to vector<8x64xf32>
    %216 = arith.mulf %215, %199 : vector<8x64xf32>
    %217 = arith.addf %157, %216 : vector<8x64xf32>
    %c3_i32_79 = arith.constant 3 : i32
    %218 = arith.index_cast %c3_i32_79 : i32 to index
    %c0_80 = arith.constant 0 : index
    %c0_81 = arith.constant 0 : index
    %219 = vector.load %arg12[%218, %c0_80, %c0_81] : memref<4x8x256xbf16, #tpu.memory_space<vmem>>, vector<1x8x256xbf16>
    %220 = vector.shape_cast %219 : vector<1x8x256xbf16> to vector<8x256xbf16>
    %221 = arith.extf %220 : vector<8x256xbf16> to vector<8x256xf32>
    %c3_i32_82 = arith.constant 3 : i32
    %222 = arith.subi %c3_i32_82, %c3_i32_79 : i32
    %223 = arith.index_cast %222 : i32 to index
    %c0_83 = arith.constant 0 : index
    %c0_84 = arith.constant 0 : index
    %224 = vector.load %arg13[%223, %c0_83, %c0_84] : memref<4x8x256xbf16, #tpu.memory_space<vmem>>, vector<1x8x256xbf16>
    %225 = vector.shape_cast %224 : vector<1x8x256xbf16> to vector<8x256xbf16>
    %226 = arith.extf %225 : vector<8x256xbf16> to vector<8x256xf32>
    %227 = arith.truncf %199 : vector<8x64xf32> to vector<8x64xbf16>
    %cst_85 = arith.constant dense<0.000000e+00> : vector<8x256xf32>
    %228 = tpu.matmul %227, %23, %cst_85 {dimension_numbers = #tpu.dot_dimension_numbers<[1], [0], [0], [1], [0, 0, 1, 1], [], []>} : vector<8x64xbf16>, vector<64x256xbf16>, vector<8x256xf32> -> vector<8x256xf32>
    %229 = arith.addf %221, %228 : vector<8x256xf32>
    %cst_86 = arith.constant 5.000000e-01 : f32
    %230 = vector.broadcast %cst_86 : f32 to vector<8x256xf32>
    %231 = arith.mulf %230, %229 : vector<8x256xf32>
    %232 = arith.select %31, %229, %231 : vector<8x256xi1>, vector<8x256xf32>
    %233 = math.tanh %232 : vector<8x256xf32>
    %cst_87 = arith.constant 5.000000e-01 : f32
    %234 = vector.broadcast %cst_87 : f32 to vector<8x256xf32>
    %235 = arith.mulf %234, %233 : vector<8x256xf32>
    %cst_88 = arith.constant 5.000000e-01 : f32
    %236 = vector.broadcast %cst_88 : f32 to vector<8x256xf32>
    %237 = arith.addf %235, %236 : vector<8x256xf32>
    %238 = arith.select %31, %233, %237 : vector<8x256xi1>, vector<8x256xf32>
    %239 = arith.truncf %208 : vector<8x64xf32> to vector<8x64xbf16>
    %cst_89 = arith.constant dense<0.000000e+00> : vector<8x256xf32>
    %240 = tpu.matmul %239, %24, %cst_89 {dimension_numbers = #tpu.dot_dimension_numbers<[1], [0], [0], [1], [0, 0, 1, 1], [], []>} : vector<8x64xbf16>, vector<64x256xbf16>, vector<8x256xf32> -> vector<8x256xf32>
    %241 = arith.addf %226, %240 : vector<8x256xf32>
    %cst_90 = arith.constant 5.000000e-01 : f32
    %242 = vector.broadcast %cst_90 : f32 to vector<8x256xf32>
    %243 = arith.mulf %242, %241 : vector<8x256xf32>
    %244 = arith.select %31, %241, %243 : vector<8x256xi1>, vector<8x256xf32>
    %245 = math.tanh %244 : vector<8x256xf32>
    %cst_91 = arith.constant 5.000000e-01 : f32
    %246 = vector.broadcast %cst_91 : f32 to vector<8x256xf32>
    %247 = arith.mulf %246, %245 : vector<8x256xf32>
    %cst_92 = arith.constant 5.000000e-01 : f32
    %248 = vector.broadcast %cst_92 : f32 to vector<8x256xf32>
    %249 = arith.addf %247, %248 : vector<8x256xf32>
    %250 = arith.select %31, %245, %249 : vector<8x256xi1>, vector<8x256xf32>
    %251 = vector.extract_strided_slice %238 {offsets = [0, 64], sizes = [8, 64], strides = [1, 1]} : vector<8x256xf32> to vector<8x64xf32>
    %252 = arith.mulf %251, %196 : vector<8x64xf32>
    %253 = vector.extract_strided_slice %238 {offsets = [0, 0], sizes = [8, 64], strides = [1, 1]} : vector<8x256xf32> to vector<8x64xf32>
    %254 = vector.extract_strided_slice %238 {offsets = [0, 128], sizes = [8, 64], strides = [1, 1]} : vector<8x256xf32> to vector<8x64xf32>
    %255 = arith.mulf %253, %254 : vector<8x64xf32>
    %256 = arith.addf %252, %255 : vector<8x64xf32>
    %257 = vector.extract_strided_slice %238 {offsets = [0, 192], sizes = [8, 64], strides = [1, 1]} : vector<8x256xf32> to vector<8x64xf32>
    %258 = math.tanh %256 : vector<8x64xf32>
    %259 = arith.mulf %257, %258 : vector<8x64xf32>
    %260 = vector.extract_strided_slice %250 {offsets = [0, 64], sizes = [8, 64], strides = [1, 1]} : vector<8x256xf32> to vector<8x64xf32>
    %261 = arith.mulf %260, %205 : vector<8x64xf32>
    %262 = vector.extract_strided_slice %250 {offsets = [0, 0], sizes = [8, 64], strides = [1, 1]} : vector<8x256xf32> to vector<8x64xf32>
    %263 = vector.extract_strided_slice %250 {offsets = [0, 128], sizes = [8, 64], strides = [1, 1]} : vector<8x256xf32> to vector<8x64xf32>
    %264 = arith.mulf %262, %263 : vector<8x64xf32>
    %265 = arith.addf %261, %264 : vector<8x64xf32>
    %266 = vector.extract_strided_slice %250 {offsets = [0, 192], sizes = [8, 64], strides = [1, 1]} : vector<8x256xf32> to vector<8x64xf32>
    %267 = math.tanh %265 : vector<8x64xf32>
    %268 = arith.mulf %266, %267 : vector<8x64xf32>
    %269 = arith.addi %32, %c3_i32_79 : i32
    %c1_i32_93 = arith.constant 1 : i32
    %270 = arith.addi %269, %c1_i32_93 : i32
    %271 = vector.broadcast %270 : i32 to vector<8x1xi32>
    %272 = arith.cmpi eq, %25, %271 : vector<8x1xi32>
    %273 = arith.extui %272 : vector<8x1xi1> to vector<8x1xi32>
    %274 = arith.sitofp %273 : vector<8x1xi32> to vector<8x1xf32>
    %275 = vector.broadcast %274 : vector<8x1xf32> to vector<8x64xf32>
    %276 = arith.mulf %275, %259 : vector<8x64xf32>
    %277 = arith.addf %217, %276 : vector<8x64xf32>
    %c4_i32_94 = arith.constant 4 : i32
    %c0_95 = arith.constant 0 : index
    %c0_96 = arith.constant 0 : index
    %278 = vector.load %arg14[%c0_95, %c0_96] : memref<8x64xf32, #tpu.memory_space<vmem>>, vector<8x64xf32>
    tpu.vector_store %arg14[%c0_95, %c0_96], %259 {strides = array<i32>} : memref<8x64xf32, #tpu.memory_space<vmem>>, vector<8x64xf32>,
    %c0_97 = arith.constant 0 : index
    %c0_98 = arith.constant 0 : index
    %279 = vector.load %arg15[%c0_97, %c0_98] : memref<8x64xf32, #tpu.memory_space<vmem>>, vector<8x64xf32>
    tpu.vector_store %arg15[%c0_97, %c0_98], %256 {strides = array<i32>} : memref<8x64xf32, #tpu.memory_space<vmem>>, vector<8x64xf32>,
    %c0_99 = arith.constant 0 : index
    %c0_100 = arith.constant 0 : index
    %280 = vector.load %arg16[%c0_99, %c0_100] : memref<8x64xf32, #tpu.memory_space<vmem>>, vector<8x64xf32>
    tpu.vector_store %arg16[%c0_99, %c0_100], %268 {strides = array<i32>} : memref<8x64xf32, #tpu.memory_space<vmem>>, vector<8x64xf32>,
    %c0_101 = arith.constant 0 : index
    %c0_102 = arith.constant 0 : index
    %281 = vector.load %arg17[%c0_101, %c0_102] : memref<8x64xf32, #tpu.memory_space<vmem>>, vector<8x64xf32>
    tpu.vector_store %arg17[%c0_101, %c0_102], %265 {strides = array<i32>} : memref<8x64xf32, #tpu.memory_space<vmem>>, vector<8x64xf32>,
    %c0_103 = arith.constant 0 : index
    %c0_104 = arith.constant 0 : index
    %282 = vector.load %arg18[%c0_103, %c0_104] : memref<8x64xf32, #tpu.memory_space<vmem>>, vector<8x64xf32>
    tpu.vector_store %arg18[%c0_103, %c0_104], %277 {strides = array<i32>} : memref<8x64xf32, #tpu.memory_space<vmem>>, vector<8x64xf32>,
    %c1_i32_105 = arith.constant 1 : i32
    %283 = arith.cmpi eq, %arg1, %c1_i32_105 : i32
    %284 = arith.extui %283 : i1 to i32
    %c0_i32_106 = arith.constant 0 : i32
    %285 = arith.cmpi ne, %284, %c0_i32_106 : i32
    scf.if %285 {
      %286 = tpu.concatenate %277, %268 in 1 : vector<8x64xf32>, vector<8x64xf32> -> vector<8x128xf32>
      %c0_107 = arith.constant 0 : index
      %c0_108 = arith.constant 0 : index
      %287 = vector.load %arg11[%c0_107, %c0_108] : memref<8x128xf32, #tpu.memory_space<vmem>>, vector<8x128xf32>
      tpu.vector_store %arg11[%c0_107, %c0_108], %286 {strides = array<i32>} : memref<8x128xf32, #tpu.memory_space<vmem>>, vector<8x128xf32>,
    } else {
    }
    return
  }
  func.func @transform_0(%arg0: i32, %arg1: i32) -> (i32, i32, i32) {
    %c0_i32 = arith.constant 0 : i32
    %c0_i32_0 = arith.constant 0 : i32
    return %arg0, %arg1, %c0_i32 : i32, i32, i32
  }
  func.func @transform_1(%arg0: i32, %arg1: i32) -> (i32, i32, i32) {
    %c1_i32 = arith.constant 1 : i32
    %0 = arith.subi %c1_i32, %arg1 : i32
    %c0_i32 = arith.constant 0 : i32
    %c0_i32_0 = arith.constant 0 : i32
    return %arg0, %0, %c0_i32 : i32, i32, i32
  }
  func.func @transform_2(%arg0: i32, %arg1: i32) -> (i32, i32) {
    %c0_i32 = arith.constant 0 : i32
    %c0_i32_0 = arith.constant 0 : i32
    return %arg0, %c0_i32 : i32, i32
  }
  func.func @transform_3(%arg0: i32, %arg1: i32) -> (i32, i32) {
    %c0_i32 = arith.constant 0 : i32
    %c0_i32_0 = arith.constant 0 : i32
    %c0_i32_1 = arith.constant 0 : i32
    return %c0_i32, %c0_i32_0 : i32, i32
  }
  func.func @transform_4(%arg0: i32, %arg1: i32) -> (i32, i32) {
    %c0_i32 = arith.constant 0 : i32
    %c0_i32_0 = arith.constant 0 : i32
    %c0_i32_1 = arith.constant 0 : i32
    return %c0_i32, %c0_i32_0 : i32, i32
  }
  func.func @transform_5(%arg0: i32, %arg1: i32) -> (i32, i32) {
    %c0_i32 = arith.constant 0 : i32
    %c0_i32_0 = arith.constant 0 : i32
    %c0_i32_1 = arith.constant 0 : i32
    return %c0_i32, %c0_i32_0 : i32, i32
  }
  func.func @transform_6(%arg0: i32, %arg1: i32) -> (i32, i32) {
    %c0_i32 = arith.constant 0 : i32
    %c0_i32_0 = arith.constant 0 : i32
    %c0_i32_1 = arith.constant 0 : i32
    return %c0_i32, %c0_i32_0 : i32, i32
  }
  func.func @transform_7(%arg0: i32, %arg1: i32) -> (i32, i32) {
    %c0_i32 = arith.constant 0 : i32
    %c0_i32_0 = arith.constant 0 : i32
    %c0_i32_1 = arith.constant 0 : i32
    return %c0_i32, %c0_i32_0 : i32, i32
  }
  func.func @transform_8(%arg0: i32, %arg1: i32) -> (i32, i32) {
    %c0_i32 = arith.constant 0 : i32
    %c0_i32_0 = arith.constant 0 : i32
    %c0_i32_1 = arith.constant 0 : i32
    return %c0_i32, %c0_i32_0 : i32, i32
  }
  func.func @transform_9(%arg0: i32, %arg1: i32) -> (i32, i32) {
    %c0_i32 = arith.constant 0 : i32
    %c0_i32_0 = arith.constant 0 : i32
    return %arg0, %c0_i32 : i32, i32
  }
}

</mosaic_0001>

<llo_original>
// kernel: tpu_custom_call.1
$region0: #{tpu_custom_call.1}
  #allocation0 [shape = 'u32[]', space=smem, size = 0x4, offset = 0x4, fixed_abs, tag = 'smem constant byte address 0x4 - core index']
  #allocation1 [shape = 'u32[144,128]{1,0:T(1,128)}', space=vmem, size = 0x12000, scoped, tag = 'internal scratch']
  #allocation2 [shape = 'bf16[4,8,256]{2,1,0:T(8,128)(2,1)}', space=vmem, size = 0x4000, scoped, tag = 'scratch operand']
  #allocation3 [shape = 'bf16[4,8,256]{2,1,0:T(8,128)(2,1)}', space=vmem, size = 0x4000, scoped, tag = 'scratch operand']
  #allocation4 [shape = 'f32[8,64]{1,0:T(8,128)}', space=vmem, size = 0x1000, scoped, tag = 'scratch operand']
  #allocation5 [shape = 'f32[8,64]{1,0:T(8,128)}', space=vmem, size = 0x1000, scoped, tag = 'scratch operand']
  #allocation6 [shape = 'f32[8,64]{1,0:T(8,128)}', space=vmem, size = 0x1000, scoped, tag = 'scratch operand']
  #allocation7 [shape = 'f32[8,64]{1,0:T(8,128)}', space=vmem, size = 0x1000, scoped, tag = 'scratch operand']
  #allocation8 [shape = 'f32[8,64]{1,0:T(8,128)}', space=vmem, size = 0x1000, scoped, tag = 'scratch operand']
  %s0 = inlined_call_operand.vmem [shape: bf16[1,64,32], index: 0, kind: input, shape index: {}]
  %s1 = inlined_call_operand.vmem [shape: bf16[1,64,32], index: 1, kind: input, shape index: {}]
  %s2 = inlined_call_operand.vmem [shape: s32[8,1], index: 2, kind: input, shape index: {}]
  %s3 = inlined_call_operand.vmem [shape: bf16[32,256], index: 3, kind: input, shape index: {}]
  %s4 = inlined_call_operand.hbm [shape: bf16[32,256], index: 4, kind: input, shape index: {}]
  %s5 = inlined_call_operand.vmem [shape: bf16[64,256], index: 5, kind: input, shape index: {}]
  %s6 = inlined_call_operand.hbm [shape: bf16[64,256], index: 6, kind: input, shape index: {}]
  %s7 = inlined_call_operand.vmem [shape: f32[1,256], index: 7, kind: input, shape index: {}]
  %s8 = inlined_call_operand.vmem [shape: f32[1,256], index: 8, kind: input, shape index: {}]
  %s9 = inlined_call_operand.hbm [shape: f32[8,128], index: 9, kind: output, shape index: {}]
  %s10 = sld [smem:[#allocation0]]
  $region85: #{tpu_custom_call.1} parent=0
    _
  %s12 = ssub.s32 1, %s10
  %s13 = scalar_select 0, %s12, %s10
  $region1: #{tpu_custom_call.1} parent=0
    #allocation9 [shape = 'u8[16384]{0}', space=vmem, size = 0x4000, scoped, tag = 'input window, operand 4, single buffered']
    #allocation10 [shape = 's32[2]{0}', space=sflag, size = 0x8, scoped, tag = 'scoped memory for tpu_custom_call.1']
    #allocation11 [shape = 's32[2]{0}', space=sflag, size = 0x8, scoped, tag = 'scoped memory for tpu_custom_call.1']
    #allocation12 [shape = 'u8[32768]{0}', space=vmem, size = 0x8000, scoped, tag = 'input window, operand 6, single buffered']
    #allocation13 [shape = 's32[1]{0}', space=sflag, size = 0x4, scoped, tag = 'scoped memory for tpu_custom_call.1']
    #allocation14 [shape = 'u8[4096]{0}', space=vmem, size = 0x1000, scoped, tag = 'output window, operand 0, single buffered']
    %14 = vsyncpa [#allocation10], 0
    %15 = vsyncpa [#allocation13], 0
    %16 = vsyncpa [#allocation11], 0
    loop: start=0, step=1, limit=4
    $region2: #{tpu_custom_call.1} parent=1 // loop_pre_header
      _
    $region3: #{tpu_custom_call.1} parent=1 // loop_header
      %s18 = sphi 0, %s22
      %p19 = scmp.ge.s32.totalorder %s18, 4
      %s25 = sphi 0, %s37
      %s26 = sphi 0, %s33
      %s27 = sphi 0, %s25
      %s28 = sphi 0, %s26
      %s29 = sphi 0, %s27
      %s30 = sphi 0, %s28
      %s42 = sphi 0, %s44
      %s45 = sphi 0, %s42
      %s46 = sphi 0, %s45
      %s62 = sphi 0, %s46
      %s72 = sphi 0, %s74
      %s75 = sphi 0, %s72
      %s76 = sphi 0, %s75
      %s92 = sphi 0, %s76
      %s98 = sphi 0, %s100
      %s101 = sphi 0, %s98
      %s102 = sphi 0, %s101
      %s118 = sphi 0, %s102
      %s122 = sphi 0, %s122
      %s124 = sphi 0, %s122
      %s125 = sphi 0, %s124
      %s139 = sphi 0, %s125
      %s143 = sphi 0, %s143
      %s145 = sphi 0, %s143
      %s146 = sphi 0, %s145
      %s160 = sphi 0, %s146
      %s164 = sphi 0, %s164
      %s166 = sphi 0, %s164
      %s167 = sphi 0, %s166
      %s181 = sphi 0, %s167
      %s185 = sphi 0, %s185
      %s187 = sphi 0, %s185
      %s188 = sphi 0, %s187
      %s202 = sphi 0, %s188
      %s206 = sphi 0, %s206
      %s208 = sphi 0, %s206
      %s209 = sphi 0, %s208
      %s223 = sphi 0, %s209
      %s227 = sphi 0, %s227
      %s229 = sphi 0, %s227
      %s230 = sphi 0, %s229
      %s244 = sphi 0, %s230
      %s250 = sphi 0, %s252
      %s253 = sphi 0, %s250
      %s254 = sphi 0, %s253
      %s270 = sphi 0, %s254
    $region4: #{tpu_custom_call.1} parent=1 // loop_header_branch
      %21 = sbr.rel (%p19) target = $region8
    $region5: #{tpu_custom_call.1} parent=1 // loop_body
      %s23 = ssub.s32 %s18, 1
      %s24 = ssub.s32 %s18, 2
      %s31 = sadd.s32 1, %s26
      %p32 = scmp.ge.s32.totalorder %s31, 2
      %s33 = scalar_select %p32, 0, %s31
      %s34 = sadd.s32 1, %s25
      %s35 = scalar_select %p32, %s34, %s25
      %p36 = scmp.ge.s32.totalorder %s35, 1
      %s37 = scalar_select %p36, 0, %s35
      %s38 = ssub.s32 %s25, %s37
      %s39 = ssub.s32 %s26, %s33
      %s40 = sor.u32 %s38, %s39
      %p41 = scmp.eq.s32.totalorder %s40, 0
      %s43 = sadd.s32 %s42, 1
      %s44 = scalar_select %p41, %s42, %s43
      %p47 = pneg %p41
      %p48 = scmp.eq.s32.totalorder %s18, 1
      %p49 = por %p47, %p48
      %p50 = scmp.ne.s32.totalorder %s42, %s45
      %p51 = scmp.eq.s32.totalorder %s18, 0
      %p52 = por %p50, %p51
      %p53 = scmp.ne.s32.totalorder %s42, %s45
      %p54 = scmp.eq.s32.totalorder %s23, 1
      %p55 = por %p53, %p54
      %p56 = scmp.ne.s32.totalorder %s45, %s46
      %p57 = scmp.eq.s32.totalorder %s23, 0
      %p58 = por %p56, %p57
      %p59 = scmp.ne.s32.totalorder %s45, %s46
      %p60 = scmp.eq.s32.totalorder %s24, 1
      %p61 = por %p59, %p60
      %p63 = scmp.ne.s32.totalorder %s46, %s62
      %p64 = scmp.eq.s32.totalorder %s24, 0
      %p65 = por %p63, %p64
      %s66 = ssub.s32 1, %s26
      %s67 = ssub.s32 1, %s33
      %s68 = ssub.s32 %s25, %s37
      %s69 = ssub.s32 %s66, %s67
      %s70 = sor.u32 %s68, %s69
      %p71 = scmp.eq.s32.totalorder %s70, 0
      %s73 = sadd.s32 %s72, 1
      %s74 = scalar_select %p71, %s72, %s73
      %p77 = pneg %p71
      %p78 = scmp.eq.s32.totalorder %s18, 1
      %p79 = por %p77, %p78
      %p80 = scmp.ne.s32.totalorder %s72, %s75
      %p81 = scmp.eq.s32.totalorder %s18, 0
      %p82 = por %p80, %p81
      %p83 = scmp.ne.s32.totalorder %s72, %s75
      %p84 = scmp.eq.s32.totalorder %s23, 1
      %p85 = por %p83, %p84
      %p86 = scmp.ne.s32.totalorder %s75, %s76
      %p87 = scmp.eq.s32.totalorder %s23, 0
      %p88 = por %p86, %p87
      %p89 = scmp.ne.s32.totalorder %s75, %s76
      %p90 = scmp.eq.s32.totalorder %s24, 1
      %p91 = por %p89, %p90
      %p93 = scmp.ne.s32.totalorder %s76, %s92
      %p94 = scmp.eq.s32.totalorder %s24, 0
      %p95 = por %p93, %p94
      %s96 = ssub.s32 %s25, %s37
      %p97 = scmp.eq.s32.totalorder %s96, 0
      %s99 = sadd.s32 %s98, 1
      %s100 = scalar_select %p97, %s98, %s99
      %p103 = pneg %p97
      %p104 = scmp.eq.s32.totalorder %s18, 1
      %p105 = por %p103, %p104
      %p106 = scmp.ne.s32.totalorder %s98, %s101
      %p107 = scmp.eq.s32.totalorder %s18, 0
      %p108 = por %p106, %p107
      %p109 = scmp.ne.s32.totalorder %s98, %s101
      %p110 = scmp.eq.s32.totalorder %s23, 1
      %p111 = por %p109, %p110
      %p112 = scmp.ne.s32.totalorder %s101, %s102
      %p113 = scmp.eq.s32.totalorder %s23, 0
      %p114 = por %p112, %p113
      %p115 = scmp.ne.s32.totalorder %s101, %s102
      %p116 = scmp.eq.s32.totalorder %s24, 1
      %p117 = por %p115, %p116
      %p119 = scmp.ne.s32.totalorder %s102, %s118
      %p120 = scmp.eq.s32.totalorder %s24, 0
      %p121 = por %p119, %p120
      %s123 = sadd.s32 %s122, 1
      %p126 = scmp.eq.s32.totalorder %s18, 1
      %p127 = scmp.ne.s32.totalorder %s122, %s124
      %p128 = scmp.eq.s32.totalorder %s18, 0
      %p129 = por %p127, %p128
      %p130 = scmp.ne.s32.totalorder %s122, %s124
      %p131 = scmp.eq.s32.totalorder %s23, 1
      %p132 = por %p130, %p131
      %p133 = scmp.ne.s32.totalorder %s124, %s125
      %p134 = scmp.eq.s32.totalorder %s23, 0
      %p135 = por %p133, %p134
      %p136 = scmp.ne.s32.totalorder %s124, %s125
      %p137 = scmp.eq.s32.totalorder %s24, 1
      %p138 = por %p136, %p137
      %p140 = scmp.ne.s32.totalorder %s125, %s139
      %p141 = scmp.eq.s32.totalorder %s24, 0
      %p142 = por %p140, %p141
      %s144 = sadd.s32 %s143, 1
      %p147 = scmp.eq.s32.totalorder %s18, 1
      %p148 = scmp.ne.s32.totalorder %s143, %s145
      %p149 = scmp.eq.s32.totalorder %s18, 0
      %p150 = por %p148, %p149
      %p151 = scmp.ne.s32.totalorder %s143, %s145
      %p152 = scmp.eq.s32.totalorder %s23, 1
      %p153 = por %p151, %p152
      %p154 = scmp.ne.s32.totalorder %s145, %s146
      %p155 = scmp.eq.s32.totalorder %s23, 0
      %p156 = por %p154, %p155
      %p157 = scmp.ne.s32.totalorder %s145, %s146
      %p158 = scmp.eq.s32.totalorder %s24, 1
      %p159 = por %p157, %p158
      %p161 = scmp.ne.s32.totalorder %s146, %s160
      %p162 = scmp.eq.s32.totalorder %s24, 0
      %p163 = por %p161, %p162
      %s165 = sadd.s32 %s164, 1
      %p168 = scmp.eq.s32.totalorder %s18, 1
      %p169 = scmp.ne.s32.totalorder %s164, %s166
      %p170 = scmp.eq.s32.totalorder %s18, 0
      %p171 = por %p169, %p170
      %p172 = scmp.ne.s32.totalorder %s164, %s166
      %p173 = scmp.eq.s32.totalorder %s23, 1
      %p174 = por %p172, %p173
      %p175 = scmp.ne.s32.totalorder %s166, %s167
      %p176 = scmp.eq.s32.totalorder %s23, 0
      %p177 = por %p175, %p176
      %p178 = scmp.ne.s32.totalorder %s166, %s167
      %p179 = scmp.eq.s32.totalorder %s24, 1
      %p180 = por %p178, %p179
      %p182 = scmp.ne.s32.totalorder %s167, %s181
      %p183 = scmp.eq.s32.totalorder %s24, 0
      %p184 = por %p182, %p183
      %s186 = sadd.s32 %s185, 1
      %p189 = scmp.eq.s32.totalorder %s18, 1
      %p190 = scmp.ne.s32.totalorder %s185, %s187
      %p191 = scmp.eq.s32.totalorder %s18, 0
      %p192 = por %p190, %p191
      %p193 = scmp.ne.s32.totalorder %s185, %s187
      %p194 = scmp.eq.s32.totalorder %s23, 1
      %p195 = por %p193, %p194
      %p196 = scmp.ne.s32.totalorder %s187, %s188
      %p197 = scmp.eq.s32.totalorder %s23, 0
      %p198 = por %p196, %p197
      %p199 = scmp.ne.s32.totalorder %s187, %s188
      %p200 = scmp.eq.s32.totalorder %s24, 1
      %p201 = por %p199, %p200
      %p203 = scmp.ne.s32.totalorder %s188, %s202
      %p204 = scmp.eq.s32.totalorder %s24, 0
      %p205 = por %p203, %p204
      %s207 = sadd.s32 %s206, 1
      %p210 = scmp.eq.s32.totalorder %s18, 1
      %p211 = scmp.ne.s32.totalorder %s206, %s208
      %p212 = scmp.eq.s32.totalorder %s18, 0
      %p213 = por %p211, %p212
      %p214 = scmp.ne.s32.totalorder %s206, %s208
      %p215 = scmp.eq.s32.totalorder %s23, 1
      %p216 = por %p214, %p215
      %p217 = scmp.ne.s32.totalorder %s208, %s209
      %p218 = scmp.eq.s32.totalorder %s23, 0
      %p219 = por %p217, %p218
      %p220 = scmp.ne.s32.totalorder %s208, %s209
      %p221 = scmp.eq.s32.totalorder %s24, 1
      %p222 = por %p220, %p221
      %p224 = scmp.ne.s32.totalorder %s209, %s223
      %p225 = scmp.eq.s32.totalorder %s24, 0
      %p226 = por %p224, %p225
      %s228 = sadd.s32 %s227, 1
      %p231 = scmp.eq.s32.totalorder %s18, 1
      %p232 = scmp.ne.s32.totalorder %s227, %s229
      %p233 = scmp.eq.s32.totalorder %s18, 0
      %p234 = por %p232, %p233
      %p235 = scmp.ne.s32.totalorder %s227, %s229
      %p236 = scmp.eq.s32.totalorder %s23, 1
      %p237 = por %p235, %p236
      %p238 = scmp.ne.s32.totalorder %s229, %s230
      %p239 = scmp.eq.s32.totalorder %s23, 0
      %p240 = por %p238, %p239
      %p241 = scmp.ne.s32.totalorder %s229, %s230
      %p242 = scmp.eq.s32.totalorder %s24, 1
      %p243 = por %p241, %p242
      %p245 = scmp.ne.s32.totalorder %s230, %s244
      %p246 = scmp.eq.s32.totalorder %s24, 0
      %p247 = por %p245, %p246
      %s248 = ssub.s32 %s25, %s37
      %p249 = scmp.eq.s32.totalorder %s248, 0
      %s251 = sadd.s32 %s250, 1
      %s252 = scalar_select %p249, %s250, %s251
      %p255 = pneg %p249
      %p256 = scmp.eq.s32.totalorder %s18, 1
      %p257 = por %p255, %p256
      %p258 = scmp.ne.s32.totalorder %s250, %s253
      %p259 = scmp.eq.s32.totalorder %s18, 0
      %p260 = por %p258, %p259
      %p261 = scmp.ne.s32.totalorder %s250, %s253
      %p262 = scmp.eq.s32.totalorder %s23, 1
      %p263 = por %p261, %p262
      %p264 = scmp.ne.s32.totalorder %s253, %s254
      %p265 = scmp.eq.s32.totalorder %s23, 0
      %p266 = por %p264, %p265
      %p267 = scmp.ne.s32.totalorder %s253, %s254
      %p268 = scmp.eq.s32.totalorder %s24, 1
      %p269 = por %p267, %p268
      %p271 = scmp.ne.s32.totalorder %s254, %s270
      %p272 = scmp.eq.s32.totalorder %s24, 0
      %p273 = por %p271, %p272
      %p274 = scmp.le.s32.totalorder 1, %s18
      %p275 = scmp.lt.s32.totalorder %s18, 3
      %p276 = pnand %p274, %p275
      %p277 = pneg %p276
      // Predicated region
      $region9: #{tpu_custom_call.1} parent=5 // pred_check
        _
      $region10: #{tpu_custom_call.1} parent=5 // pred_check_branch
        %279 = sbr.rel (%p276) target = $region12
      $region11: #{tpu_custom_call.1} parent=5 // pred_region
        %s280 = ssub.s32 %s18, 1
        // Predicated region
        $region13: #{tpu_custom_call.1} parent=11 // pred_check
          %p281 = pneg %p114
        $region14: #{tpu_custom_call.1} parent=11 // pred_check_branch
          %283 = sbr.rel (%p281) target = $region16
        $region15: #{tpu_custom_call.1} parent=11 // pred_region
          %p284 = scmp.lt.s32.totalorder %s27, 0
          %s285 = scalar_select %p284, %s27, 0
          %s286 = smul.addr %s285, 8
          %s287 = scalar_lea.vmem %s2, %s286
        $region16: #{tpu_custom_call.1} parent=11 // pred_fallthru
          _
        // Predicated region
        $region17: #{tpu_custom_call.1} parent=11 // pred_check
          %p288 = pneg %p135
        $region18: #{tpu_custom_call.1} parent=11 // pred_check_branch
          %290 = sbr.rel (%p288) target = $region20
        $region19: #{tpu_custom_call.1} parent=11 // pred_region
          _
        $region20: #{tpu_custom_call.1} parent=11 // pred_fallthru
          _
        // Predicated region
        $region21: #{tpu_custom_call.1} parent=11 // pred_check
          %p291 = pneg %p156
        $region22: #{tpu_custom_call.1} parent=11 // pred_check_branch
          %293 = sbr.rel (%p291) target = $region24
        $region23: #{tpu_custom_call.1} parent=11 // pred_region
          %s295 = ssub.s32 512, 512
          %296 = vsyncadd [#allocation10], %s295
          %s297 = sshll.u32 [#allocation9], 4
          %s298 = int_to_ptr.vmem [resolvable:$true] %s297
          %303 = dma.hbm_to_vmem [thread:$0]  %s4, 512, %s298, [#allocation10], 128, 128, 8
        $region24: #{tpu_custom_call.1} parent=11 // pred_fallthru
          _
        // Predicated region
        $region25: #{tpu_custom_call.1} parent=11 // pred_check
          %p304 = pneg %p177
        $region26: #{tpu_custom_call.1} parent=11 // pred_check_branch
          %306 = sbr.rel (%p304) target = $region28
        $region27: #{tpu_custom_call.1} parent=11 // pred_region
          _
        $region28: #{tpu_custom_call.1} parent=11 // pred_fallthru
          _
        // Predicated region
        $region29: #{tpu_custom_call.1} parent=11 // pred_check
          %p307 = pneg %p198
        $region30: #{tpu_custom_call.1} parent=11 // pred_check_branch
          %309 = sbr.rel (%p307) target = $region32
        $region31: #{tpu_custom_call.1} parent=11 // pred_region
          %s311 = ssub.s32 1024, 1024
          %312 = vsyncadd [#allocation13], %s311
          %s313 = sshll.u32 [#allocation12], 4
          %s314 = int_to_ptr.vmem [resolvable:$true] %s313
          %319 = dma.hbm_to_vmem [thread:$0]  %s6, 1024, %s314, [#allocation13], 128, 128, 8
        $region32: #{tpu_custom_call.1} parent=11 // pred_fallthru
          _
        // Predicated region
        $region33: #{tpu_custom_call.1} parent=11 // pred_check
          %p320 = pneg %p219
        $region34: #{tpu_custom_call.1} parent=11 // pred_check_branch
          %322 = sbr.rel (%p320) target = $region36
        $region35: #{tpu_custom_call.1} parent=11 // pred_region
          _
        $region36: #{tpu_custom_call.1} parent=11 // pred_fallthru
          _
        // Predicated region
        $region37: #{tpu_custom_call.1} parent=11 // pred_check
          %p323 = pneg %p240
        $region38: #{tpu_custom_call.1} parent=11 // pred_check_branch
          %325 = sbr.rel (%p323) target = $region40
        $region39: #{tpu_custom_call.1} parent=11 // pred_region
          _
        $region40: #{tpu_custom_call.1} parent=11 // pred_fallthru
          _
      $region12: #{tpu_custom_call.1} parent=5 // pred_fallthru
        _
      %p326 = scmp.lt.s32.totalorder %s18, 2
      // Predicated region
      $region41: #{tpu_custom_call.1} parent=5 // pred_check
        %p327 = pneg %p326
      $region42: #{tpu_custom_call.1} parent=5 // pred_check_branch
        %329 = sbr.rel (%p327) target = $region44
      $region43: #{tpu_custom_call.1} parent=5 // pred_region
        // Predicated region
        $region45: #{tpu_custom_call.1} parent=43 // pred_check
          %p330 = pneg %p52
        $region46: #{tpu_custom_call.1} parent=43 // pred_check_branch
          %332 = sbr.rel (%p330) target = $region48
        $region47: #{tpu_custom_call.1} parent=43 // pred_region
          %s333 = smul.u32 4, %s26
          %p334 = scmp.lt.s32.totalorder %s25, 0
          %s335 = scalar_select %p334, %s25, 0
          %p336 = scmp.lt.s32.totalorder %s333, 7
          %s337 = scalar_select %p336, %s333, 7
          %s338 = smul.addr %s335, 8
          %s339 = sadd.s32 %s337, %s338
          %s340 = smul.addr %s339, 4
          %s341 = scalar_lea.vmem %s0, %s340
          %s342 = smul.u32 4, %s26
        $region48: #{tpu_custom_call.1} parent=43 // pred_fallthru
          _
        // Predicated region
        $region49: #{tpu_custom_call.1} parent=43 // pred_check
          %p343 = pneg %p82
        $region50: #{tpu_custom_call.1} parent=43 // pred_check_branch
          %345 = sbr.rel (%p343) target = $region52
        $region51: #{tpu_custom_call.1} parent=43 // pred_region
          %s346 = ssub.s32 1, %s26
          %s347 = smul.u32 4, %s346
          %p348 = scmp.lt.s32.totalorder %s25, 0
          %s349 = scalar_select %p348, %s25, 0
          %p350 = scmp.lt.s32.totalorder %s347, 7
          %s351 = scalar_select %p350, %s347, 7
          %s352 = smul.addr %s349, 8
          %s353 = sadd.s32 %s351, %s352
          %s354 = smul.addr %s353, 4
          %s355 = scalar_lea.vmem %s1, %s354
          %s356 = ssub.s32 1, %s26
          %s357 = smul.u32 4, %s356
        $region52: #{tpu_custom_call.1} parent=43 // pred_fallthru
          _
      $region44: #{tpu_custom_call.1} parent=5 // pred_fallthru
        _
      %p358 = scmp.le.s32.totalorder 1, %s18
      %p359 = scmp.lt.s32.totalorder %s18, 3
      %p360 = pnand %p358, %p359
      %p361 = pneg %p360
      // Predicated region
      $region53: #{tpu_custom_call.1} parent=5 // pred_check
        _
      $region54: #{tpu_custom_call.1} parent=5 // pred_check_branch
        %363 = sbr.rel (%p360) target = $region56
      $region55: #{tpu_custom_call.1} parent=5 // pred_region
        %s364 = ssub.s32 %s18, 1
        // Predicated region
        $region57: #{tpu_custom_call.1} parent=55 // pred_check
          %p365 = pneg %p156
        $region58: #{tpu_custom_call.1} parent=55 // pred_check_branch
          %367 = sbr.rel (%p365) target = $region60
        $region59: #{tpu_custom_call.1} parent=55 // pred_region
          %368 = dma.done [#allocation10], 512
        $region60: #{tpu_custom_call.1} parent=55 // pred_fallthru
          _
        // Predicated region
        $region61: #{tpu_custom_call.1} parent=55 // pred_check
          %p369 = pneg %p198
        $region62: #{tpu_custom_call.1} parent=55 // pred_check_branch
          %371 = sbr.rel (%p369) target = $region64
        $region63: #{tpu_custom_call.1} parent=55 // pred_region
          %372 = dma.done [#allocation13], 1024
        $region64: #{tpu_custom_call.1} parent=55 // pred_fallthru
          _
        %s373 = smul.u32 4, %s28
        %p374 = scmp.lt.s32.totalorder %s27, 0
        %s375 = scalar_select %p374, %s27, 0
        %p376 = scmp.lt.s32.totalorder %s373, 7
        %s377 = scalar_select %p376, %s373, 7
        %s378 = smul.addr %s375, 8
        %s379 = sadd.s32 %s377, %s378
        %s380 = smul.addr %s379, 4
        %s381 = scalar_lea.vmem %s0, %s380
        %p382 = pneg %p58
        %p383 = pneg %p55
        %s384 = ssub.s32 1, %s28
        %s385 = smul.u32 4, %s384
        %p386 = scmp.lt.s32.totalorder %s27, 0
        %s387 = scalar_select %p386, %s27, 0
        %p388 = scmp.lt.s32.totalorder %s385, 7
        %s389 = scalar_select %p388, %s385, 7
        %s390 = smul.addr %s387, 8
        %s391 = sadd.s32 %s389, %s390
        %s392 = smul.addr %s391, 4
        %s393 = scalar_lea.vmem %s1, %s392
        %p394 = pneg %p88
        %p395 = pneg %p85
        %p396 = scmp.lt.s32.totalorder %s27, 0
        %s397 = scalar_select %p396, %s27, 0
        %s398 = smul.addr %s397, 8
        %s399 = scalar_lea.vmem %s2, %s398
        %p400 = pneg %p114
        %p401 = pneg %p111
        %p402 = pneg %p135
        %p403 = pneg %p132
        %p404 = pneg %p156
        %p405 = pneg %p153
        %p406 = pneg %p177
        %p407 = pneg %p174
        %p408 = pneg %p198
        %p409 = pneg %p195
        %p410 = pneg %p219
        %p411 = pneg %p216
        %p412 = pneg %p240
        %p413 = pneg %p237
        %p414 = pneg %p266
        %p415 = pneg %p263
        %s416 = smul.u32 4, %s28
        %p417 = scmp.lt.s32.totalorder %s27, 0
        %s418 = scalar_select %p417, %s27, 0
        %p419 = scmp.lt.s32.totalorder %s416, 7
        %s420 = scalar_select %p419, %s416, 7
        %s421 = smul.addr %s418, 8
        %s422 = sadd.s32 %s420, %s421
        %s423 = smul.addr %s422, 4
        %s424 = scalar_lea.vmem %s0, %s423
        %s425 = smul.u32 4, %s28
        %s426 = ssub.s32 1, %s28
        %s427 = smul.u32 4, %s426
        %p428 = scmp.lt.s32.totalorder %s27, 0
        %s429 = scalar_select %p428, %s27, 0
        %p430 = scmp.lt.s32.totalorder %s427, 7
        %s431 = scalar_select %p430, %s427, 7
        %s432 = smul.addr %s429, 8
        %s433 = sadd.s32 %s431, %s432
        %s434 = smul.addr %s433, 4
        %s435 = scalar_lea.vmem %s1, %s434
        %s436 = ssub.s32 1, %s28
        %s437 = smul.u32 4, %s436
        %p438 = scmp.lt.s32.totalorder %s27, 0
        %s439 = scalar_select %p438, %s27, 0
        %s440 = smul.addr %s439, 8
        %s441 = scalar_lea.vmem %s2, %s440
        %p443 = scmp.eq.s32.totalorder %s28, 0
        // Predicated region
        $region65: #{tpu_custom_call.1} parent=55 // pred_check
          %p444 = pneg %p443
        $region66: #{tpu_custom_call.1} parent=55 // pred_check_branch
          %446 = sbr.rel (%p444) target = $region68
        $region67: #{tpu_custom_call.1} parent=55 // pred_region
          %vm447 = vcmask 523264
          %448 = vst.msk [vmem:[#allocation4] sm:$0xff] %vm447, 0.0
          %449 = vst.msk [vmem:[#allocation5] sm:$0xff] %vm447, 0.0
          %450 = vst.msk [vmem:[#allocation6] sm:$0xff] %vm447, 0.0
          %451 = vst.msk [vmem:[#allocation7] sm:$0xff] %vm447, 0.0
          %452 = vst.msk [vmem:[#allocation8] sm:$0xff] %vm447, 0.0
        $region68: #{tpu_custom_call.1} parent=55 // pred_fallthru
          _
        %v453 = vld [vmem:[%s424] sm:$0xf]
        %v454 = vld [vmem:[%s424 + $0x4] sm:$0xf]
        %v455 = vld [vmem:[%s424 + $0x8] sm:$0xf]
        %v456 = vld [vmem:[%s424 + $0xc] sm:$0xf]
        %v457 = vld [vmem:[%s3] sm:$0xff]
        %v458 = vld [vmem:[%s3 + $0x8] sm:$0xff]
        %v459 = vld [vmem:[%s3 + $0x10] sm:$0xff]
        %v460 = vld [vmem:[%s3 + $0x18] sm:$0xff]
        %v461 = vld [vmem:[%s7] sm:$0x3]
        %v463 = vlaneseq
        %v464 = vshrl.u32 %v463, 7
        %v465 = vsub.s32 0, %v464
        %v466 = vrot.slane %v461, %v465
        %v467 = vlaneseq
        %v468 = vshrl.u32 %v467, 7
        %v469 = vsub.s32 1, %v468
        %v470 = vrot.slane %v461, %v469
        %v477 = vunpack.c.l.b16 %v453
        %v478 = vunpack.c.l.b16 %v454
        %v479 = vunpack.c.l.b16 %v455
        %v480 = vunpack.c.l.b16 %v456
        %v481 = vpack.c.b16 %v478, %v477
        %v482 = vpack.c.b16 %v480, %v479
        %v487 = vunpack.c.l.b16 %v457
        %v488 = vunpack.c.h.b16 %v457
        %v489 = vunpack.c.l.b16 %v458
        %v490 = vunpack.c.h.b16 %v458
        %v491 = vunpack.c.l.b16 %v459
        %v492 = vunpack.c.h.b16 %v459
        %v493 = vunpack.c.l.b16 %v460
        %v494 = vunpack.c.h.b16 %v460
        %v495 = vpack.c.b16 %v489, %v487
        %v496 = vpack.c.b16 %v490, %v488
        %v497 = vpack.c.b16 %v493, %v491
        %v498 = vpack.c.b16 %v494, %v492
        %vm503 = vcmask 261120
        %v505 = vsel %vm503, %v481, 0
        %v508 = vsel %vm503, %v482, 0
        %510 = vmatprep.subr.bf16.mxu0 %v496
        %511 = vmatpush1.bf16.msra.mxu0 %v495
        %512 = vmatprep.subr.bf16.mxu0 %v498
        %513 = vmatpush1.bf16.msra.mxu0 %v497
        %514 = vmatprep.subr.bf16.mxu0 0
        %515 = vmatpush1.bf16.msra.mxu0 0
        %516 = vmatprep.subr.bf16.mxu0 0
        %517 = vmatpush1.bf16.msra.mxu0 0
        %518 = vmatprep.subr.bf16.mxu0 0
        %519 = vmatpush1.bf16.msra.mxu0 0
        %520 = vmatprep.subr.bf16.mxu0 0
        %521 = vmatpush1.bf16.msra.mxu0 0
        %522 = vmatprep.subr.bf16.mxu0 0
        %523 = vmatpush1.bf16.msra.mxu0 0
        %524 = vmatprep.subr.bf16.mxu0 0
        %525 = vmatpush1.bf16.msra.mxu0 0
        %526 = vmatprep.subr.bf16.mxu0 0
        %527 = vmatpush1.bf16.msra.mxu0 0
        %528 = vmatprep.subr.bf16.mxu0 0
        %529 = vmatpush1.bf16.msra.mxu0 0
        %530 = vmatprep.subr.bf16.mxu0 0
        %531 = vmatpush1.bf16.msra.mxu0 0
        %532 = vmatprep.subr.bf16.mxu0 0
        %533 = vmatpush1.bf16.msra.mxu0 0
        %534 = vmatprep.subr.bf16.mxu0 0
        %535 = vmatpush1.bf16.msra.mxu0 0
        %536 = vmatprep.subr.bf16.mxu0 0
        %537 = vmatpush1.bf16.msra.mxu0 0
        %538 = vmatprep.subr.bf16.mxu0 0
        %539 = vmatpush1.bf16.msra.mxu0 0
        %540 = vmatprep.subr.bf16.mxu0 0
        %541 = vmatpush1.bf16.msra.mxu0 0
        %542 = vmatprep.mubr.bf16.mxu0 0
        %543 = vmatmul.mubr.bf16.gmra.mrb[0].mxu0 %v505
        %v544 = vpop.f32.mrb[0].mxu0
        %v545 = vadd.f32 %v466, %v544
        %v546 = vpop.f32.mrb[0].mxu0
        %v547 = vadd.f32 %v470, %v546
        %v548 = vpop.f32.mrb[0].mxu0
        %v549 = vadd.f32 %v466, %v548
        %v550 = vpop.f32.mrb[0].mxu0
        %v551 = vadd.f32 %v470, %v550
        %552 = vmatprep.mubr.bf16.mxu0 0
        %553 = vmatmul.mubr.bf16.gmra.mrb[0].mxu0 %v508
        %v554 = vpop.f32.mrb[0].mxu0
        %v555 = vadd.f32 %v466, %v554
        %v556 = vpop.f32.mrb[0].mxu0
        %v557 = vadd.f32 %v470, %v556
        %v558 = vpop.f32.mrb[0].mxu0
        %v559 = vadd.f32 %v466, %v558
        %v560 = vpop.f32.mrb[0].mxu0
        %v561 = vadd.f32 %v470, %v560
        %562 = vdwg.mxu0
        %v563 = vpack.c.bf16 %v545, %v545
        %v564 = vpack.c.bf16 %v547, %v547
        %v565 = vpack.c.bf16 %v549, %v549
        %v566 = vpack.c.bf16 %v551, %v551
        %v567 = vpack.c.bf16 %v555, %v555
        %v568 = vpack.c.bf16 %v557, %v557
        %v569 = vpack.c.bf16 %v559, %v559
        %v570 = vpack.c.bf16 %v561, %v561
        %v579 = vunpack.c.l.b16 %v563
        %v580 = vunpack.c.l.b16 %v564
        %v581 = vunpack.c.l.b16 %v565
        %v582 = vunpack.c.l.b16 %v566
        %v583 = vunpack.c.l.b16 %v567
        %v584 = vunpack.c.l.b16 %v568
        %v585 = vunpack.c.l.b16 %v569
        %v586 = vunpack.c.l.b16 %v570
        %v587 = vpack.c.b16 %v580, %v579
        %v588 = vpack.c.b16 %v582, %v581
        %v589 = vpack.c.b16 %v584, %v583
        %v590 = vpack.c.b16 %v586, %v585
        %595 = vst [vmem:[#allocation2] sm:$0xff] %v587
        %596 = vst [vmem:[#allocation2 + $0x8] sm:$0xff] %v588
        %597 = vst [vmem:[#allocation2 + $0x10] sm:$0xff] %v589
        %598 = vst [vmem:[#allocation2 + $0x18] sm:$0xff] %v590
        %v599 = vld [vmem:[%s435] sm:$0xf]
        %v600 = vld [vmem:[%s435 + $0x4] sm:$0xf]
        %v601 = vld [vmem:[%s435 + $0x8] sm:$0xf]
        %v602 = vld [vmem:[%s435 + $0xc] sm:$0xf]
        %v603 = vld [vmem:[#allocation9] sm:$0xff]
        %v604 = vld [vmem:[#allocation9 + $0x8] sm:$0xff]
        %v605 = vld [vmem:[#allocation9 + $0x10] sm:$0xff]
        %v606 = vld [vmem:[#allocation9 + $0x18] sm:$0xff]
        %v607 = vld [vmem:[%s8] sm:$0x3]
        %v609 = vlaneseq
        %v610 = vshrl.u32 %v609, 7
        %v611 = vsub.s32 0, %v610
        %v612 = vrot.slane %v607, %v611
        %v613 = vlaneseq
        %v614 = vshrl.u32 %v613, 7
        %v615 = vsub.s32 1, %v614
        %v616 = vrot.slane %v607, %v615
        %v623 = vunpack.c.l.b16 %v599
        %v624 = vunpack.c.l.b16 %v600
        %v625 = vunpack.c.l.b16 %v601
        %v626 = vunpack.c.l.b16 %v602
        %v627 = vpack.c.b16 %v624, %v623
        %v628 = vpack.c.b16 %v626, %v625
        %v633 = vunpack.c.l.b16 %v603
        %v634 = vunpack.c.h.b16 %v603
        %v635 = vunpack.c.l.b16 %v604
        %v636 = vunpack.c.h.b16 %v604
        %v637 = vunpack.c.l.b16 %v605
        %v638 = vunpack.c.h.b16 %v605
        %v639 = vunpack.c.l.b16 %v606
        %v640 = vunpack.c.h.b16 %v606
        %v641 = vpack.c.b16 %v635, %v633
        %v642 = vpack.c.b16 %v636, %v634
        %v643 = vpack.c.b16 %v639, %v637
        %v644 = vpack.c.b16 %v640, %v638
        %v650 = vsel %vm503, %v627, 0
        %v653 = vsel %vm503, %v628, 0
        %655 = vmatprep.subr.bf16.mxu0 %v642
        %656 = vmatpush1.bf16.msra.mxu0 %v641
        %657 = vmatprep.subr.bf16.mxu0 %v644
        %658 = vmatpush1.bf16.msra.mxu0 %v643
        %659 = vmatprep.subr.bf16.mxu0 0
        %660 = vmatpush1.bf16.msra.mxu0 0
        %661 = vmatprep.subr.bf16.mxu0 0
        %662 = vmatpush1.bf16.msra.mxu0 0
        %663 = vmatprep.subr.bf16.mxu0 0
        %664 = vmatpush1.bf16.msra.mxu0 0
        %665 = vmatprep.subr.bf16.mxu0 0
        %666 = vmatpush1.bf16.msra.mxu0 0
        %667 = vmatprep.subr.bf16.mxu0 0
        %668 = vmatpush1.bf16.msra.mxu0 0
        %669 = vmatprep.subr.bf16.mxu0 0
        %670 = vmatpush1.bf16.msra.mxu0 0
        %671 = vmatprep.subr.bf16.mxu0 0
        %672 = vmatpush1.bf16.msra.mxu0 0
        %673 = vmatprep.subr.bf16.mxu0 0
        %674 = vmatpush1.bf16.msra.mxu0 0
        %675 = vmatprep.subr.bf16.mxu0 0
        %676 = vmatpush1.bf16.msra.mxu0 0
        %677 = vmatprep.subr.bf16.mxu0 0
        %678 = vmatpush1.bf16.msra.mxu0 0
        %679 = vmatprep.subr.bf16.mxu0 0
        %680 = vmatpush1.bf16.msra.mxu0 0
        %681 = vmatprep.subr.bf16.mxu0 0
        %682 = vmatpush1.bf16.msra.mxu0 0
        %683 = vmatprep.subr.bf16.mxu0 0
        %684 = vmatpush1.bf16.msra.mxu0 0
        %685 = vmatprep.subr.bf16.mxu0 0
        %686 = vmatpush1.bf16.msra.mxu0 0
        %687 = vmatprep.mubr.bf16.mxu0 0
        %688 = vmatmul.mubr.bf16.gmra.mrb[0].mxu0 %v650
        %v689 = vpop.f32.mrb[0].mxu0
        %v690 = vadd.f32 %v612, %v689
        %v691 = vpop.f32.mrb[0].mxu0
        %v692 = vadd.f32 %v616, %v691
        %v693 = vpop.f32.mrb[0].mxu0
        %v694 = vadd.f32 %v612, %v693
        %v695 = vpop.f32.mrb[0].mxu0
        %v696 = vadd.f32 %v616, %v695
        %697 = vmatprep.mubr.bf16.mxu0 0
        %698 = vmatmul.mubr.bf16.gmra.mrb[0].mxu0 %v653
        %v699 = vpop.f32.mrb[0].mxu0
        %v700 = vadd.f32 %v612, %v699
        %v701 = vpop.f32.mrb[0].mxu0
        %v702 = vadd.f32 %v616, %v701
        %v703 = vpop.f32.mrb[0].mxu0
        %v704 = vadd.f32 %v612, %v703
        %v705 = vpop.f32.mrb[0].mxu0
        %v706 = vadd.f32 %v616, %v705
        %707 = vdwg.mxu0
        %v708 = vpack.c.bf16 %v690, %v690
        %v709 = vpack.c.bf16 %v692, %v692
        %v710 = vpack.c.bf16 %v694, %v694
        %v711 = vpack.c.bf16 %v696, %v696
        %v712 = vpack.c.bf16 %v700, %v700
        %v713 = vpack.c.bf16 %v702, %v702
        %v714 = vpack.c.bf16 %v704, %v704
        %v715 = vpack.c.bf16 %v706, %v706
        %v724 = vunpack.c.l.b16 %v708
        %v725 = vunpack.c.l.b16 %v709
        %v726 = vunpack.c.l.b16 %v710
        %v727 = vunpack.c.l.b16 %v711
        %v728 = vunpack.c.l.b16 %v712
        %v729 = vunpack.c.l.b16 %v713
        %v730 = vunpack.c.l.b16 %v714
        %v731 = vunpack.c.l.b16 %v715
        %v732 = vpack.c.b16 %v725, %v724
        %v733 = vpack.c.b16 %v727, %v726
        %v734 = vpack.c.b16 %v729, %v728
        %v735 = vpack.c.b16 %v731, %v730
        %740 = vst [vmem:[#allocation3] sm:$0xff] %v732
        %741 = vst [vmem:[#allocation3 + $0x8] sm:$0xff] %v733
        %742 = vst [vmem:[#allocation3 + $0x10] sm:$0xff] %v734
        %743 = vst [vmem:[#allocation3 + $0x18] sm:$0xff] %v735
        %v744 = vld [vmem:[%s5] sm:$0xff]
        %v745 = vld [vmem:[%s5 + $0x8] sm:$0xff]
        %v746 = vld [vmem:[%s5 + $0x10] sm:$0xff]
        %v747 = vld [vmem:[%s5 + $0x18] sm:$0xff]
        %v748 = vld [vmem:[%s5 + $0x20] sm:$0xff]
        %v749 = vld [vmem:[%s5 + $0x28] sm:$0xff]
        %v750 = vld [vmem:[%s5 + $0x30] sm:$0xff]
        %v751 = vld [vmem:[%s5 + $0x38] sm:$0xff]
        %v752 = vld [vmem:[#allocation12] sm:$0xff]
        %v753 = vld [vmem:[#allocation12 + $0x8] sm:$0xff]
        %v754 = vld [vmem:[#allocation12 + $0x10] sm:$0xff]
        %v755 = vld [vmem:[#allocation12 + $0x18] sm:$0xff]
        %v756 = vld [vmem:[#allocation12 + $0x20] sm:$0xff]
        %v757 = vld [vmem:[#allocation12 + $0x28] sm:$0xff]
        %v758 = vld [vmem:[#allocation12 + $0x30] sm:$0xff]
        %v759 = vld [vmem:[#allocation12 + $0x38] sm:$0xff]
        %v760 = vld [vmem:[%s441] sm:$0xff]
        %v761 = vlaneseq
        %v762 = vand.u32 %v761, 127
        %v763 = vadd.s32 %v762, 128
        %vm764 = vcmp.ge.s32.totalorder %v762, 128
        %vm765 = vcmp.ge.s32.totalorder %v763, 128
        %vm766 = vcmp.lt.s32.totalorder %v762, 192
        %vm767 = vcmp.lt.s32.totalorder %v763, 192
        %vm768 = vmand %vm764, %vm766
        %vm769 = vmand %vm765, %vm767
        %s770 = smul.u32 %s28, 4
        %v771 = vld [vmem:[#allocation4] sm:$0xff]
        %v772 = vld [vmem:[#allocation5] sm:$0xff]
        %v773 = vld [vmem:[#allocation6] sm:$0xff]
        %v774 = vld [vmem:[#allocation7] sm:$0xff]
        %v775 = vld [vmem:[#allocation8] sm:$0xff]
        %v776 = vld [vmem:[#allocation2] sm:$0xff]
        %v777 = vunpack.c.l.bf16 %v776
        %v778 = vunpack.c.h.bf16 %v776
        %s779 = scalar_lea.vmem [#allocation3], 24
        %v780 = vld [vmem:[%s779] sm:$0xff]
        %v781 = vunpack.c.l.bf16 %v780
        %v782 = vunpack.c.h.bf16 %v780
        %v783 = vpack.c.bf16 %v771, %v771
        %v792 = vunpack.c.l.b16 %v744
        %v793 = vunpack.c.h.b16 %v744
        %v794 = vunpack.c.l.b16 %v745
        %v795 = vunpack.c.h.b16 %v745
        %v796 = vunpack.c.l.b16 %v746
        %v797 = vunpack.c.h.b16 %v746
        %v798 = vunpack.c.l.b16 %v747
        %v799 = vunpack.c.h.b16 %v747
        %v800 = vunpack.c.l.b16 %v748
        %v801 = vunpack.c.h.b16 %v748
        %v802 = vunpack.c.l.b16 %v749
        %v803 = vunpack.c.h.b16 %v749
        %v804 = vunpack.c.l.b16 %v750
        %v805 = vunpack.c.h.b16 %v750
        %v806 = vunpack.c.l.b16 %v751
        %v807 = vunpack.c.h.b16 %v751
        %v808 = vpack.c.b16 %v794, %v792
        %v809 = vpack.c.b16 %v795, %v793
        %v810 = vpack.c.b16 %v798, %v796
        %v811 = vpack.c.b16 %v799, %v797
        %v812 = vpack.c.b16 %v802, %v800
        %v813 = vpack.c.b16 %v803, %v801
        %v814 = vpack.c.b16 %v806, %v804
        %v815 = vpack.c.b16 %v807, %v805
        %vm824 = vcmask 523264
        %v826 = vsel %vm824, %v783, 0
        %828 = vmatprep.subr.bf16.mxu0 %v809
        %829 = vmatpush1.bf16.msra.mxu0 %v808
        %830 = vmatprep.subr.bf16.mxu0 %v811
        %831 = vmatpush1.bf16.msra.mxu0 %v810
        %832 = vmatprep.subr.bf16.mxu0 %v813
        %833 = vmatpush1.bf16.msra.mxu0 %v812
        %834 = vmatprep.subr.bf16.mxu0 %v815
        %835 = vmatpush1.bf16.msra.mxu0 %v814
        %836 = vmatprep.subr.bf16.mxu0 0
        %837 = vmatpush1.bf16.msra.mxu0 0
        %838 = vmatprep.subr.bf16.mxu0 0
        %839 = vmatpush1.bf16.msra.mxu0 0
        %840 = vmatprep.subr.bf16.mxu0 0
        %841 = vmatpush1.bf16.msra.mxu0 0
        %842 = vmatprep.subr.bf16.mxu0 0
        %843 = vmatpush1.bf16.msra.mxu0 0
        %844 = vmatprep.subr.bf16.mxu0 0
        %845 = vmatpush1.bf16.msra.mxu0 0
        %846 = vmatprep.subr.bf16.mxu0 0
        %847 = vmatpush1.bf16.msra.mxu0 0
        %848 = vmatprep.subr.bf16.mxu0 0
        %849 = vmatpush1.bf16.msra.mxu0 0
        %850 = vmatprep.subr.bf16.mxu0 0
        %851 = vmatpush1.bf16.msra.mxu0 0
        %852 = vmatprep.subr.bf16.mxu0 0
        %853 = vmatpush1.bf16.msra.mxu0 0
        %854 = vmatprep.subr.bf16.mxu0 0
        %855 = vmatpush1.bf16.msra.mxu0 0
        %856 = vmatprep.subr.bf16.mxu0 0
        %857 = vmatpush1.bf16.msra.mxu0 0
        %858 = vmatprep.subr.bf16.mxu0 0
        %859 = vmatpush1.bf16.msra.mxu0 0
        %860 = vmatprep.mubr.bf16.mxu0 0
        %861 = vmatmul.mubr.bf16.gmra.mrb[0].mxu0 %v826
        %v862 = vpop.f32.mrb[0].mxu0
        %v863 = vadd.f32 0.0, %v862
        %v864 = vpop.f32.mrb[0].mxu0
        %v865 = vadd.f32 0.0, %v864
        %v866 = vpop.f32.mrb[0].mxu0
        %v867 = vpop.f32.mrb[0].mxu0
        %868 = vdwg.mxu0
        %v869 = vadd.f32 %v777, %v863
        %v870 = vadd.f32 %v778, %v865
        %v871 = vmul.f32 %v869, 0.5
        %v872 = vmul.f32 %v870, 0.5
        %v873 = vsel %vm768, %v869, %v871
        %v874 = vsel %vm769, %v870, %v872
        %v875 = vtanh.pop %v873
        %v876 = vtanh.pop %v874
        %v877 = vmul.f32 %v875, 0.5
        %v878 = vmul.f32 %v876, 0.5
        %v879 = vadd.f32 %v877, 0.5
        %v880 = vadd.f32 %v878, 0.5
        %v881 = vsel %vm768, %v875, %v879
        %v882 = vsel %vm769, %v876, %v880
        %v883 = vpack.c.bf16 %v773, %v773
        %v892 = vunpack.c.l.b16 %v752
        %v893 = vunpack.c.h.b16 %v752
        %v894 = vunpack.c.l.b16 %v753
        %v895 = vunpack.c.h.b16 %v753
        %v896 = vunpack.c.l.b16 %v754
        %v897 = vunpack.c.h.b16 %v754
        %v898 = vunpack.c.l.b16 %v755
        %v899 = vunpack.c.h.b16 %v755
        %v900 = vunpack.c.l.b16 %v756
        %v901 = vunpack.c.h.b16 %v756
        %v902 = vunpack.c.l.b16 %v757
        %v903 = vunpack.c.h.b16 %v757
        %v904 = vunpack.c.l.b16 %v758
        %v905 = vunpack.c.h.b16 %v758
        %v906 = vunpack.c.l.b16 %v759
        %v907 = vunpack.c.h.b16 %v759
        %v908 = vpack.c.b16 %v894, %v892
        %v909 = vpack.c.b16 %v895, %v893
        %v910 = vpack.c.b16 %v898, %v896
        %v911 = vpack.c.b16 %v899, %v897
        %v912 = vpack.c.b16 %v902, %v900
        %v913 = vpack.c.b16 %v903, %v901
        %v914 = vpack.c.b16 %v906, %v904
        %v915 = vpack.c.b16 %v907, %v905
        %v925 = vsel %vm824, %v883, 0
        %927 = vmatprep.subr.bf16.mxu0 %v909
        %928 = vmatpush1.bf16.msra.mxu0 %v908
        %929 = vmatprep.subr.bf16.mxu0 %v911
        %930 = vmatpush1.bf16.msra.mxu0 %v910
        %931 = vmatprep.subr.bf16.mxu0 %v913
        %932 = vmatpush1.bf16.msra.mxu0 %v912
        %933 = vmatprep.subr.bf16.mxu0 %v915
        %934 = vmatpush1.bf16.msra.mxu0 %v914
        %935 = vmatprep.subr.bf16.mxu0 0
        %936 = vmatpush1.bf16.msra.mxu0 0
        %937 = vmatprep.subr.bf16.mxu0 0
        %938 = vmatpush1.bf16.msra.mxu0 0
        %939 = vmatprep.subr.bf16.mxu0 0
        %940 = vmatpush1.bf16.msra.mxu0 0
        %941 = vmatprep.subr.bf16.mxu0 0
        %942 = vmatpush1.bf16.msra.mxu0 0
        %943 = vmatprep.subr.bf16.mxu0 0
        %944 = vmatpush1.bf16.msra.mxu0 0
        %945 = vmatprep.subr.bf16.mxu0 0
        %946 = vmatpush1.bf16.msra.mxu0 0
        %947 = vmatprep.subr.bf16.mxu0 0
        %948 = vmatpush1.bf16.msra.mxu0 0
        %949 = vmatprep.subr.bf16.mxu0 0
        %950 = vmatpush1.bf16.msra.mxu0 0
        %951 = vmatprep.subr.bf16.mxu0 0
        %952 = vmatpush1.bf16.msra.mxu0 0
        %953 = vmatprep.subr.bf16.mxu0 0
        %954 = vmatpush1.bf16.msra.mxu0 0
        %955 = vmatprep.subr.bf16.mxu0 0
        %956 = vmatpush1.bf16.msra.mxu0 0
        %957 = vmatprep.subr.bf16.mxu0 0
        %958 = vmatpush1.bf16.msra.mxu0 0
        %959 = vmatprep.mubr.bf16.mxu0 0
        %960 = vmatmul.mubr.bf16.gmra.mrb[0].mxu0 %v925
        %v961 = vpop.f32.mrb[0].mxu0
        %v962 = vadd.f32 0.0, %v961
        %v963 = vpop.f32.mrb[0].mxu0
        %v964 = vadd.f32 0.0, %v963
        %v965 = vpop.f32.mrb[0].mxu0
        %v966 = vpop.f32.mrb[0].mxu0
        %967 = vdwg.mxu0
        %v968 = vadd.f32 %v781, %v962
        %v969 = vadd.f32 %v782, %v964
        %v970 = vmul.f32 %v968, 0.5
        %v971 = vmul.f32 %v969, 0.5
        %v972 = vsel %vm768, %v968, %v970
        %v973 = vsel %vm769, %v969, %v971
        %v974 = vtanh.pop %v972
        %v975 = vtanh.pop %v973
        %v976 = vmul.f32 %v974, 0.5
        %v977 = vmul.f32 %v975, 0.5
        %v978 = vadd.f32 %v976, 0.5
        %v979 = vadd.f32 %v977, 0.5
        %v980 = vsel %vm768, %v974, %v978
        %v981 = vsel %vm769, %v975, %v979
        %983 = vrot.lane.b32.xlu0 %v772, 64
        %v984 = vpop.permute.xlu0 %983
        %v986 = vmul.f32 %v881, %v984
        %v987 = vmul.f32 %v881, %v882
        %989 = vrot.lane.b32.xlu0 %v987, 64
        %v990 = vpop.permute.xlu0 %989
        %v992 = vadd.f32 %v986, %v990
        %v993 = vtanh.pop %v992
        %v994 = vmul.f32 %v882, %v993
        %996 = vrot.lane.b32.xlu0 %v774, 64
        %v997 = vpop.permute.xlu0 %996
        %v999 = vmul.f32 %v980, %v997
        %v1000 = vmul.f32 %v980, %v981
        %1002 = vrot.lane.b32.xlu0 %v1000, 64
        %v1003 = vpop.permute.xlu0 %1002
        %v1005 = vadd.f32 %v999, %v1003
        %v1006 = vtanh.pop %v1005
        %v1007 = vmul.f32 %v981, %v1006
        %s1008 = sadd.s32 %s770, 1
        %v1009 = vstv %s1008
        %vm1010 = vcmp.eq.s32.totalorder %v760, %v1009
        %v1011 = vsel %vm1010, 1, 0
        %v1012 = vcvt.s32.f32 %v1011
        %1014 = vset.pattern.permute.xlu0 0
        %1015 = vperm.xlu0 %1014, %v1012
        %v1016 = vpop.permute.xlu0 %1015
        %v1018 = vmul.f32 %v1016, %v994
        %1020 = vrot.lane.b32.xlu0 %v1018, 64
        %v1021 = vpop.permute.xlu0 %1020
        %v1023 = vadd.f32 %v775, %v1021
        %s1024 = scalar_lea.vmem [#allocation2], 8
        %v1025 = vld [vmem:[%s1024] sm:$0xff]
        %v1026 = vunpack.c.l.bf16 %v1025
        %v1027 = vunpack.c.h.bf16 %v1025
        %s1028 = scalar_lea.vmem [#allocation3], 16
        %v1029 = vld [vmem:[%s1028] sm:$0xff]
        %v1030 = vunpack.c.l.bf16 %v1029
        %v1031 = vunpack.c.h.bf16 %v1029
        %v1032 = vpack.c.bf16 %v994, %v994
        %1034 = vrot.lane.b32.xlu0 %v1032, 64
        %v1035 = vpop.permute.xlu0 %1034
        %v1037 = vsel %vm824, %v1035, 0
        %1039 = vmatprep.subr.bf16.mxu0 %v809
        %1040 = vmatpush1.bf16.msra.mxu0 %v808
        %1041 = vmatprep.subr.bf16.mxu0 %v811
        %1042 = vmatpush1.bf16.msra.mxu0 %v810
        %1043 = vmatprep.subr.bf16.mxu0 %v813
        %1044 = vmatpush1.bf16.msra.mxu0 %v812
        %1045 = vmatprep.subr.bf16.mxu0 %v815
        %1046 = vmatpush1.bf16.msra.mxu0 %v814
        %1047 = vmatprep.subr.bf16.mxu0 0
        %1048 = vmatpush1.bf16.msra.mxu0 0
        %1049 = vmatprep.subr.bf16.mxu0 0
        %1050 = vmatpush1.bf16.msra.mxu0 0
        %1051 = vmatprep.subr.bf16.mxu0 0
        %1052 = vmatpush1.bf16.msra.mxu0 0
        %1053 = vmatprep.subr.bf16.mxu0 0
        %1054 = vmatpush1.bf16.msra.mxu0 0
        %1055 = vmatprep.subr.bf16.mxu0 0
        %1056 = vmatpush1.bf16.msra.mxu0 0
        %1057 = vmatprep.subr.bf16.mxu0 0
        %1058 = vmatpush1.bf16.msra.mxu0 0
        %1059 = vmatprep.subr.bf16.mxu0 0
        %1060 = vmatpush1.bf16.msra.mxu0 0
        %1061 = vmatprep.subr.bf16.mxu0 0
        %1062 = vmatpush1.bf16.msra.mxu0 0
        %1063 = vmatprep.subr.bf16.mxu0 0
        %1064 = vmatpush1.bf16.msra.mxu0 0
        %1065 = vmatprep.subr.bf16.mxu0 0
        %1066 = vmatpush1.bf16.msra.mxu0 0
        %1067 = vmatprep.subr.bf16.mxu0 0
        %1068 = vmatpush1.bf16.msra.mxu0 0
        %1069 = vmatprep.subr.bf16.mxu0 0
        %1070 = vmatpush1.bf16.msra.mxu0 0
        %1071 = vmatprep.mubr.bf16.mxu0 0
        %1072 = vmatmul.mubr.bf16.gmra.mrb[0].mxu0 %v1037
        %v1073 = vpop.f32.mrb[0].mxu0
        %v1074 = vadd.f32 0.0, %v1073
        %v1075 = vpop.f32.mrb[0].mxu0
        %v1076 = vadd.f32 0.0, %v1075
        %v1077 = vpop.f32.mrb[0].mxu0
        %v1078 = vpop.f32.mrb[0].mxu0
        %1079 = vdwg.mxu0
        %v1080 = vadd.f32 %v1026, %v1074
        %v1081 = vadd.f32 %v1027, %v1076
        %v1082 = vmul.f32 %v1080, 0.5
        %v1083 = vmul.f32 %v1081, 0.5
        %v1084 = vsel %vm768, %v1080, %v1082
        %v1085 = vsel %vm769, %v1081, %v1083
        %v1086 = vtanh.pop %v1084
        %v1087 = vtanh.pop %v1085
        %v1088 = vmul.f32 %v1086, 0.5
        %v1089 = vmul.f32 %v1087, 0.5
        %v1090 = vadd.f32 %v1088, 0.5
        %v1091 = vadd.f32 %v1089, 0.5
        %v1092 = vsel %vm768, %v1086, %v1090
        %v1093 = vsel %vm769, %v1087, %v1091
        %v1094 = vpack.c.bf16 %v1007, %v1007
        %1096 = vrot.lane.b32.xlu0 %v1094, 64
        %v1097 = vpop.permute.xlu0 %1096
        %v1099 = vsel %vm824, %v1097, 0
        %1101 = vmatprep.subr.bf16.mxu0 %v909
        %1102 = vmatpush1.bf16.msra.mxu0 %v908
        %1103 = vmatprep.subr.bf16.mxu0 %v911
        %1104 = vmatpush1.bf16.msra.mxu0 %v910
        %1105 = vmatprep.subr.bf16.mxu0 %v913
        %1106 = vmatpush1.bf16.msra.mxu0 %v912
        %1107 = vmatprep.subr.bf16.mxu0 %v915
        %1108 = vmatpush1.bf16.msra.mxu0 %v914
        %1109 = vmatprep.subr.bf16.mxu0 0
        %1110 = vmatpush1.bf16.msra.mxu0 0
        %1111 = vmatprep.subr.bf16.mxu0 0
        %1112 = vmatpush1.bf16.msra.mxu0 0
        %1113 = vmatprep.subr.bf16.mxu0 0
        %1114 = vmatpush1.bf16.msra.mxu0 0
        %1115 = vmatprep.subr.bf16.mxu0 0
        %1116 = vmatpush1.bf16.msra.mxu0 0
        %1117 = vmatprep.subr.bf16.mxu0 0
        %1118 = vmatpush1.bf16.msra.mxu0 0
        %1119 = vmatprep.subr.bf16.mxu0 0
        %1120 = vmatpush1.bf16.msra.mxu0 0
        %1121 = vmatprep.subr.bf16.mxu0 0
        %1122 = vmatpush1.bf16.msra.mxu0 0
        %1123 = vmatprep.subr.bf16.mxu0 0
        %1124 = vmatpush1.bf16.msra.mxu0 0
        %1125 = vmatprep.subr.bf16.mxu0 0
        %1126 = vmatpush1.bf16.msra.mxu0 0
        %1127 = vmatprep.subr.bf16.mxu0 0
        %1128 = vmatpush1.bf16.msra.mxu0 0
        %1129 = vmatprep.subr.bf16.mxu0 0
        %1130 = vmatpush1.bf16.msra.mxu0 0
        %1131 = vmatprep.subr.bf16.mxu0 0
        %1132 = vmatpush1.bf16.msra.mxu0 0
        %1133 = vmatprep.mubr.bf16.mxu0 0
        %1134 = vmatmul.mubr.bf16.gmra.mrb[0].mxu0 %v1099
        %v1135 = vpop.f32.mrb[0].mxu0
        %v1136 = vadd.f32 0.0, %v1135
        %v1137 = vpop.f32.mrb[0].mxu0
        %v1138 = vadd.f32 0.0, %v1137
        %v1139 = vpop.f32.mrb[0].mxu0
        %v1140 = vpop.f32.mrb[0].mxu0
        %1141 = vdwg.mxu0
        %v1142 = vadd.f32 %v1030, %v1136
        %v1143 = vadd.f32 %v1031, %v1138
        %v1144 = vmul.f32 %v1142, 0.5
        %v1145 = vmul.f32 %v1143, 0.5
        %v1146 = vsel %vm768, %v1142, %v1144
        %v1147 = vsel %vm769, %v1143, %v1145
        %v1148 = vtanh.pop %v1146
        %v1149 = vtanh.pop %v1147
        %v1150 = vmul.f32 %v1148, 0.5
        %v1151 = vmul.f32 %v1149, 0.5
        %v1152 = vadd.f32 %v1150, 0.5
        %v1153 = vadd.f32 %v1151, 0.5
        %v1154 = vsel %vm768, %v1148, %v1152
        %v1155 = vsel %vm769, %v1149, %v1153
        %v1156 = vmul.f32 %v1092, %v992
        %v1157 = vmul.f32 %v1092, %v1093
        %1159 = vrot.lane.b32.xlu0 %v1157, 64
        %v1160 = vpop.permute.xlu0 %1159
        %v1162 = vadd.f32 %v1156, %v1160
        %v1163 = vtanh.pop %v1162
        %v1164 = vmul.f32 %v1093, %v1163
        %v1165 = vmul.f32 %v1154, %v1005
        %v1166 = vmul.f32 %v1154, %v1155
        %1168 = vrot.lane.b32.xlu0 %v1166, 64
        %v1169 = vpop.permute.xlu0 %1168
        %v1171 = vadd.f32 %v1165, %v1169
        %v1172 = vtanh.pop %v1171
        %v1173 = vmul.f32 %v1155, %v1172
        %s1174 = sadd.s32 %s770, 2
        %v1175 = vstv %s1174
        %vm1176 = vcmp.eq.s32.totalorder %v760, %v1175
        %v1177 = vsel %vm1176, 1, 0
        %v1178 = vcvt.s32.f32 %v1177
        %1180 = vset.pattern.permute.xlu0 0
        %1181 = vperm.xlu0 %1180, %v1178
        %v1182 = vpop.permute.xlu0 %1181
        %v1184 = vmul.f32 %v1182, %v1164
        %1186 = vrot.lane.b32.xlu0 %v1184, 64
        %v1187 = vpop.permute.xlu0 %1186
        %v1189 = vadd.f32 %v1023, %v1187
        %s1190 = scalar_lea.vmem [#allocation2], 16
        %v1191 = vld [vmem:[%s1190] sm:$0xff]
        %v1192 = vunpack.c.l.bf16 %v1191
        %v1193 = vunpack.c.h.bf16 %v1191
        %s1194 = scalar_lea.vmem [#allocation3], 8
        %v1195 = vld [vmem:[%s1194] sm:$0xff]
        %v1196 = vunpack.c.l.bf16 %v1195
        %v1197 = vunpack.c.h.bf16 %v1195
        %v1198 = vpack.c.bf16 %v1164, %v1164
        %1200 = vrot.lane.b32.xlu0 %v1198, 64
        %v1201 = vpop.permute.xlu0 %1200
        %v1203 = vsel %vm824, %v1201, 0
        %1205 = vmatprep.subr.bf16.mxu0 %v809
        %1206 = vmatpush1.bf16.msra.mxu0 %v808
        %1207 = vmatprep.subr.bf16.mxu0 %v811
        %1208 = vmatpush1.bf16.msra.mxu0 %v810
        %1209 = vmatprep.subr.bf16.mxu0 %v813
        %1210 = vmatpush1.bf16.msra.mxu0 %v812
        %1211 = vmatprep.subr.bf16.mxu0 %v815
        %1212 = vmatpush1.bf16.msra.mxu0 %v814
        %1213 = vmatprep.subr.bf16.mxu0 0
        %1214 = vmatpush1.bf16.msra.mxu0 0
        %1215 = vmatprep.subr.bf16.mxu0 0
        %1216 = vmatpush1.bf16.msra.mxu0 0
        %1217 = vmatprep.subr.bf16.mxu0 0
        %1218 = vmatpush1.bf16.msra.mxu0 0
        %1219 = vmatprep.subr.bf16.mxu0 0
        %1220 = vmatpush1.bf16.msra.mxu0 0
        %1221 = vmatprep.subr.bf16.mxu0 0
        %1222 = vmatpush1.bf16.msra.mxu0 0
        %1223 = vmatprep.subr.bf16.mxu0 0
        %1224 = vmatpush1.bf16.msra.mxu0 0
        %1225 = vmatprep.subr.bf16.mxu0 0
        %1226 = vmatpush1.bf16.msra.mxu0 0
        %1227 = vmatprep.subr.bf16.mxu0 0
        %1228 = vmatpush1.bf16.msra.mxu0 0
        %1229 = vmatprep.subr.bf16.mxu0 0
        %1230 = vmatpush1.bf16.msra.mxu0 0
        %1231 = vmatprep.subr.bf16.mxu0 0
        %1232 = vmatpush1.bf16.msra.mxu0 0
        %1233 = vmatprep.subr.bf16.mxu0 0
        %1234 = vmatpush1.bf16.msra.mxu0 0
        %1235 = vmatprep.subr.bf16.mxu0 0
        %1236 = vmatpush1.bf16.msra.mxu0 0
        %1237 = vmatprep.mubr.bf16.mxu0 0
        %1238 = vmatmul.mubr.bf16.gmra.mrb[0].mxu0 %v1203
        %v1239 = vpop.f32.mrb[0].mxu0
        %v1240 = vadd.f32 0.0, %v1239
        %v1241 = vpop.f32.mrb[0].mxu0
        %v1242 = vadd.f32 0.0, %v1241
        %v1243 = vpop.f32.mrb[0].mxu0
        %v1244 = vpop.f32.mrb[0].mxu0
        %1245 = vdwg.mxu0
        %v1246 = vadd.f32 %v1192, %v1240
        %v1247 = vadd.f32 %v1193, %v1242
        %v1248 = vmul.f32 %v1246, 0.5
        %v1249 = vmul.f32 %v1247, 0.5
        %v1250 = vsel %vm768, %v1246, %v1248
        %v1251 = vsel %vm769, %v1247, %v1249
        %v1252 = vtanh.pop %v1250
        %v1253 = vtanh.pop %v1251
        %v1254 = vmul.f32 %v1252, 0.5
        %v1255 = vmul.f32 %v1253, 0.5
        %v1256 = vadd.f32 %v1254, 0.5
        %v1257 = vadd.f32 %v1255, 0.5
        %v1258 = vsel %vm768, %v1252, %v1256
        %v1259 = vsel %vm769, %v1253, %v1257
        %v1260 = vpack.c.bf16 %v1173, %v1173
        %1262 = vrot.lane.b32.xlu0 %v1260, 64
        %v1263 = vpop.permute.xlu0 %1262
        %v1265 = vsel %vm824, %v1263, 0
        %1267 = vmatprep.subr.bf16.mxu0 %v909
        %1268 = vmatpush1.bf16.msra.mxu0 %v908
        %1269 = vmatprep.subr.bf16.mxu0 %v911
        %1270 = vmatpush1.bf16.msra.mxu0 %v910
        %1271 = vmatprep.subr.bf16.mxu0 %v913
        %1272 = vmatpush1.bf16.msra.mxu0 %v912
        %1273 = vmatprep.subr.bf16.mxu0 %v915
        %1274 = vmatpush1.bf16.msra.mxu0 %v914
        %1275 = vmatprep.subr.bf16.mxu0 0
        %1276 = vmatpush1.bf16.msra.mxu0 0
        %1277 = vmatprep.subr.bf16.mxu0 0
        %1278 = vmatpush1.bf16.msra.mxu0 0
        %1279 = vmatprep.subr.bf16.mxu0 0
        %1280 = vmatpush1.bf16.msra.mxu0 0
        %1281 = vmatprep.subr.bf16.mxu0 0
        %1282 = vmatpush1.bf16.msra.mxu0 0
        %1283 = vmatprep.subr.bf16.mxu0 0
        %1284 = vmatpush1.bf16.msra.mxu0 0
        %1285 = vmatprep.subr.bf16.mxu0 0
        %1286 = vmatpush1.bf16.msra.mxu0 0
        %1287 = vmatprep.subr.bf16.mxu0 0
        %1288 = vmatpush1.bf16.msra.mxu0 0
        %1289 = vmatprep.subr.bf16.mxu0 0
        %1290 = vmatpush1.bf16.msra.mxu0 0
        %1291 = vmatprep.subr.bf16.mxu0 0
        %1292 = vmatpush1.bf16.msra.mxu0 0
        %1293 = vmatprep.subr.bf16.mxu0 0
        %1294 = vmatpush1.bf16.msra.mxu0 0
        %1295 = vmatprep.subr.bf16.mxu0 0
        %1296 = vmatpush1.bf16.msra.mxu0 0
        %1297 = vmatprep.subr.bf16.mxu0 0
        %1298 = vmatpush1.bf16.msra.mxu0 0
        %1299 = vmatprep.mubr.bf16.mxu0 0
        %1300 = vmatmul.mubr.bf16.gmra.mrb[0].mxu0 %v1265
        %v1301 = vpop.f32.mrb[0].mxu0
        %v1302 = vadd.f32 0.0, %v1301
        %v1303 = vpop.f32.mrb[0].mxu0
        %v1304 = vadd.f32 0.0, %v1303
        %v1305 = vpop.f32.mrb[0].mxu0
        %v1306 = vpop.f32.mrb[0].mxu0
        %1307 = vdwg.mxu0
        %v1308 = vadd.f32 %v1196, %v1302
        %v1309 = vadd.f32 %v1197, %v1304
        %v1310 = vmul.f32 %v1308, 0.5
        %v1311 = vmul.f32 %v1309, 0.5
        %v1312 = vsel %vm768, %v1308, %v1310
        %v1313 = vsel %vm769, %v1309, %v1311
        %v1314 = vtanh.pop %v1312
        %v1315 = vtanh.pop %v1313
        %v1316 = vmul.f32 %v1314, 0.5
        %v1317 = vmul.f32 %v1315, 0.5
        %v1318 = vadd.f32 %v1316, 0.5
        %v1319 = vadd.f32 %v1317, 0.5
        %v1320 = vsel %vm768, %v1314, %v1318
        %v1321 = vsel %vm769, %v1315, %v1319
        %v1322 = vmul.f32 %v1258, %v1162
        %v1323 = vmul.f32 %v1258, %v1259
        %1325 = vrot.lane.b32.xlu0 %v1323, 64
        %v1326 = vpop.permute.xlu0 %1325
        %v1328 = vadd.f32 %v1322, %v1326
        %v1329 = vtanh.pop %v1328
        %v1330 = vmul.f32 %v1259, %v1329
        %v1331 = vmul.f32 %v1320, %v1171
        %v1332 = vmul.f32 %v1320, %v1321
        %1334 = vrot.lane.b32.xlu0 %v1332, 64
        %v1335 = vpop.permute.xlu0 %1334
        %v1337 = vadd.f32 %v1331, %v1335
        %v1338 = vtanh.pop %v1337
        %v1339 = vmul.f32 %v1321, %v1338
        %s1340 = sadd.s32 %s770, 3
        %v1341 = vstv %s1340
        %vm1342 = vcmp.eq.s32.totalorder %v760, %v1341
        %v1343 = vsel %vm1342, 1, 0
        %v1344 = vcvt.s32.f32 %v1343
        %1346 = vset.pattern.permute.xlu0 0
        %1347 = vperm.xlu0 %1346, %v1344
        %v1348 = vpop.permute.xlu0 %1347
        %v1350 = vmul.f32 %v1348, %v1330
        %1352 = vrot.lane.b32.xlu0 %v1350, 64
        %v1353 = vpop.permute.xlu0 %1352
        %v1355 = vadd.f32 %v1189, %v1353
        %s1356 = scalar_lea.vmem [#allocation2], 24
        %v1357 = vld [vmem:[%s1356] sm:$0xff]
        %v1358 = vunpack.c.l.bf16 %v1357
        %v1359 = vunpack.c.h.bf16 %v1357
        %v1360 = vld [vmem:[#allocation3] sm:$0xff]
        %v1361 = vunpack.c.l.bf16 %v1360
        %v1362 = vunpack.c.h.bf16 %v1360
        %v1363 = vpack.c.bf16 %v1330, %v1330
        %1365 = vrot.lane.b32.xlu0 %v1363, 64
        %v1366 = vpop.permute.xlu0 %1365
        %v1368 = vsel %vm824, %v1366, 0
        %1370 = vmatprep.subr.bf16.mxu0 %v809
        %1371 = vmatpush1.bf16.msra.mxu0 %v808
        %1372 = vmatprep.subr.bf16.mxu0 %v811
        %1373 = vmatpush1.bf16.msra.mxu0 %v810
        %1374 = vmatprep.subr.bf16.mxu0 %v813
        %1375 = vmatpush1.bf16.msra.mxu0 %v812
        %1376 = vmatprep.subr.bf16.mxu0 %v815
        %1377 = vmatpush1.bf16.msra.mxu0 %v814
        %1378 = vmatprep.subr.bf16.mxu0 0
        %1379 = vmatpush1.bf16.msra.mxu0 0
        %1380 = vmatprep.subr.bf16.mxu0 0
        %1381 = vmatpush1.bf16.msra.mxu0 0
        %1382 = vmatprep.subr.bf16.mxu0 0
        %1383 = vmatpush1.bf16.msra.mxu0 0
        %1384 = vmatprep.subr.bf16.mxu0 0
        %1385 = vmatpush1.bf16.msra.mxu0 0
        %1386 = vmatprep.subr.bf16.mxu0 0
        %1387 = vmatpush1.bf16.msra.mxu0 0
        %1388 = vmatprep.subr.bf16.mxu0 0
        %1389 = vmatpush1.bf16.msra.mxu0 0
        %1390 = vmatprep.subr.bf16.mxu0 0
        %1391 = vmatpush1.bf16.msra.mxu0 0
        %1392 = vmatprep.subr.bf16.mxu0 0
        %1393 = vmatpush1.bf16.msra.mxu0 0
        %1394 = vmatprep.subr.bf16.mxu0 0
        %1395 = vmatpush1.bf16.msra.mxu0 0
        %1396 = vmatprep.subr.bf16.mxu0 0
        %1397 = vmatpush1.bf16.msra.mxu0 0
        %1398 = vmatprep.subr.bf16.mxu0 0
        %1399 = vmatpush1.bf16.msra.mxu0 0
        %1400 = vmatprep.subr.bf16.mxu0 0
        %1401 = vmatpush1.bf16.msra.mxu0 0
        %1402 = vmatprep.mubr.bf16.mxu0 0
        %1403 = vmatmul.mubr.bf16.gmra.mrb[0].mxu0 %v1368
        %v1404 = vpop.f32.mrb[0].mxu0
        %v1405 = vadd.f32 0.0, %v1404
        %v1406 = vpop.f32.mrb[0].mxu0
        %v1407 = vadd.f32 0.0, %v1406
        %v1408 = vpop.f32.mrb[0].mxu0
        %v1409 = vpop.f32.mrb[0].mxu0
        %1410 = vdwg.mxu0
        %v1411 = vadd.f32 %v1358, %v1405
        %v1412 = vadd.f32 %v1359, %v1407
        %v1413 = vmul.f32 %v1411, 0.5
        %v1414 = vmul.f32 %v1412, 0.5
        %v1415 = vsel %vm768, %v1411, %v1413
        %v1416 = vsel %vm769, %v1412, %v1414
        %v1417 = vtanh.pop %v1415
        %v1418 = vtanh.pop %v1416
        %v1419 = vmul.f32 %v1417, 0.5
        %v1420 = vmul.f32 %v1418, 0.5
        %v1421 = vadd.f32 %v1419, 0.5
        %v1422 = vadd.f32 %v1420, 0.5
        %v1423 = vsel %vm768, %v1417, %v1421
        %v1424 = vsel %vm769, %v1418, %v1422
        %v1425 = vpack.c.bf16 %v1339, %v1339
        %1427 = vrot.lane.b32.xlu0 %v1425, 64
        %v1428 = vpop.permute.xlu0 %1427
        %v1430 = vsel %vm824, %v1428, 0
        %1432 = vmatprep.subr.bf16.mxu0 %v909
        %1433 = vmatpush1.bf16.msra.mxu0 %v908
        %1434 = vmatprep.subr.bf16.mxu0 %v911
        %1435 = vmatpush1.bf16.msra.mxu0 %v910
        %1436 = vmatprep.subr.bf16.mxu0 %v913
        %1437 = vmatpush1.bf16.msra.mxu0 %v912
        %1438 = vmatprep.subr.bf16.mxu0 %v915
        %1439 = vmatpush1.bf16.msra.mxu0 %v914
        %1440 = vmatprep.subr.bf16.mxu0 0
        %1441 = vmatpush1.bf16.msra.mxu0 0
        %1442 = vmatprep.subr.bf16.mxu0 0
        %1443 = vmatpush1.bf16.msra.mxu0 0
        %1444 = vmatprep.subr.bf16.mxu0 0
        %1445 = vmatpush1.bf16.msra.mxu0 0
        %1446 = vmatprep.subr.bf16.mxu0 0
        %1447 = vmatpush1.bf16.msra.mxu0 0
        %1448 = vmatprep.subr.bf16.mxu0 0
        %1449 = vmatpush1.bf16.msra.mxu0 0
        %1450 = vmatprep.subr.bf16.mxu0 0
        %1451 = vmatpush1.bf16.msra.mxu0 0
        %1452 = vmatprep.subr.bf16.mxu0 0
        %1453 = vmatpush1.bf16.msra.mxu0 0
        %1454 = vmatprep.subr.bf16.mxu0 0
        %1455 = vmatpush1.bf16.msra.mxu0 0
        %1456 = vmatprep.subr.bf16.mxu0 0
        %1457 = vmatpush1.bf16.msra.mxu0 0
        %1458 = vmatprep.subr.bf16.mxu0 0
        %1459 = vmatpush1.bf16.msra.mxu0 0
        %1460 = vmatprep.subr.bf16.mxu0 0
        %1461 = vmatpush1.bf16.msra.mxu0 0
        %1462 = vmatprep.subr.bf16.mxu0 0
        %1463 = vmatpush1.bf16.msra.mxu0 0
        %1464 = vmatprep.mubr.bf16.mxu0 0
        %1465 = vmatmul.mubr.bf16.gmra.mrb[0].mxu0 %v1430
        %v1466 = vpop.f32.mrb[0].mxu0
        %v1467 = vadd.f32 0.0, %v1466
        %v1468 = vpop.f32.mrb[0].mxu0
        %v1469 = vadd.f32 0.0, %v1468
        %v1470 = vpop.f32.mrb[0].mxu0
        %v1471 = vpop.f32.mrb[0].mxu0
        %1472 = vdwg.mxu0
        %v1473 = vadd.f32 %v1361, %v1467
        %v1474 = vadd.f32 %v1362, %v1469
        %v1475 = vmul.f32 %v1473, 0.5
        %v1476 = vmul.f32 %v1474, 0.5
        %v1477 = vsel %vm768, %v1473, %v1475
        %v1478 = vsel %vm769, %v1474, %v1476
        %v1479 = vtanh.pop %v1477
        %v1480 = vtanh.pop %v1478
        %v1481 = vmul.f32 %v1479, 0.5
        %v1482 = vmul.f32 %v1480, 0.5
        %v1483 = vadd.f32 %v1481, 0.5
        %v1484 = vadd.f32 %v1482, 0.5
        %v1485 = vsel %vm768, %v1479, %v1483
        %v1486 = vsel %vm769, %v1480, %v1484
        %v1487 = vmul.f32 %v1423, %v1328
        %v1488 = vmul.f32 %v1423, %v1424
        %1490 = vrot.lane.b32.xlu0 %v1488, 64
        %v1491 = vpop.permute.xlu0 %1490
        %v1493 = vadd.f32 %v1487, %v1491
        %v1494 = vtanh.pop %v1493
        %v1495 = vmul.f32 %v1424, %v1494
        %v1496 = vmul.f32 %v1485, %v1337
        %v1497 = vmul.f32 %v1485, %v1486
        %1499 = vrot.lane.b32.xlu0 %v1497, 64
        %v1500 = vpop.permute.xlu0 %1499
        %v1502 = vadd.f32 %v1496, %v1500
        %v1503 = vtanh.pop %v1502
        %v1504 = vmul.f32 %v1486, %v1503
        %s1505 = sadd.s32 %s770, 4
        %v1506 = vstv %s1505
        %vm1507 = vcmp.eq.s32.totalorder %v760, %v1506
        %v1508 = vsel %vm1507, 1, 0
        %v1509 = vcvt.s32.f32 %v1508
        %1511 = vset.pattern.permute.xlu0 0
        %1512 = vperm.xlu0 %1511, %v1509
        %v1513 = vpop.permute.xlu0 %1512
        %v1515 = vmul.f32 %v1513, %v1495
        %1517 = vrot.lane.b32.xlu0 %v1515, 64
        %v1518 = vpop.permute.xlu0 %1517
        %v1520 = vadd.f32 %v1355, %v1518
        %1522 = vrot.lane.b32.xlu0 %v1495, 64
        %v1523 = vpop.permute.xlu0 %1522
        %1525 = vst.msk [vmem:[#allocation4] sm:$0xff] %vm824, %v1523
        %1527 = vrot.lane.b32.xlu0 %v1493, 64
        %v1528 = vpop.permute.xlu0 %1527
        %1530 = vst.msk [vmem:[#allocation5] sm:$0xff] %vm824, %v1528
        %1532 = vrot.lane.b32.xlu0 %v1504, 64
        %v1533 = vpop.permute.xlu0 %1532
        %1535 = vst.msk [vmem:[#allocation6] sm:$0xff] %vm824, %v1533
        %1537 = vrot.lane.b32.xlu0 %v1502, 64
        %v1538 = vpop.permute.xlu0 %1537
        %1540 = vst.msk [vmem:[#allocation7] sm:$0xff] %vm824, %v1538
        %1541 = vst.msk [vmem:[#allocation8] sm:$0xff] %vm824, %v1520
        %p1542 = scmp.eq.s32.totalorder %s28, 1
        // Predicated region
        $region69: #{tpu_custom_call.1} parent=55 // pred_check
          %p1543 = pneg %p1542
        $region70: #{tpu_custom_call.1} parent=55 // pred_check_branch
          %1545 = sbr.rel (%p1543) target = $region72
        $region71: #{tpu_custom_call.1} parent=55 // pred_region
          %v1546 = vsel %vm824, %v1520, %v1504
          %1547 = vst [vmem:[#allocation14] sm:$0xff] %v1546
        $region72: #{tpu_custom_call.1} parent=55 // pred_fallthru
          _
        // Predicated region
        $region73: #{tpu_custom_call.1} parent=55 // pred_check
          %p1548 = pneg %p263
        $region74: #{tpu_custom_call.1} parent=55 // pred_check_branch
          %1550 = sbr.rel (%p1548) target = $region76
        $region75: #{tpu_custom_call.1} parent=55 // pred_region
          %s1552 = ssub.s32 128, 128
          %1553 = vsyncadd [#allocation11], %s1552
          %s1554 = smul.addr %s27, 128
          %s1555 = scalar_lea.hbm %s9, %s1554
          %s1557 = sshll.u32 [#allocation14], 4
          %s1558 = int_to_ptr.vmem [resolvable:$true] %s1557
          %1560 = dma.vmem_to_hbm [thread:$0]  %s1558, 128, %s1555, [#allocation11]
        $region76: #{tpu_custom_call.1} parent=55 // pred_fallthru
          _
        // Predicated region
        $region77: #{tpu_custom_call.1} parent=55 // pred_check
          %p1561 = pneg %p263
        $region78: #{tpu_custom_call.1} parent=55 // pred_check_branch
          %1563 = sbr.rel (%p1561) target = $region80
        $region79: #{tpu_custom_call.1} parent=55 // pred_region
          %1564 = dma.done [#allocation11], 128
        $region80: #{tpu_custom_call.1} parent=55 // pred_fallthru
          _
      $region56: #{tpu_custom_call.1} parent=5 // pred_fallthru
        _
      %p1565 = scmp.le.s32.totalorder 2, %s18
      // Predicated region
      $region81: #{tpu_custom_call.1} parent=5 // pred_check
        %p1566 = pneg %p1565
      $region82: #{tpu_custom_call.1} parent=5 // pred_check_branch
        %1568 = sbr.rel (%p1566) target = $region84
      $region83: #{tpu_custom_call.1} parent=5 // pred_region
        %s1569 = ssub.s32 %s18, 2
      $region84: #{tpu_custom_call.1} parent=5 // pred_fallthru
        _
    $region6: #{tpu_custom_call.1} parent=1 // loop_footer
      %s22 = sadd.s32 1, %s18
    $region7: #{tpu_custom_call.1} parent=1 // loop_footer_branch
      %17 = sbr.rel target = $region3
    $region8: #{tpu_custom_call.1} parent=1 // loop_exit
      _
    %1570 = vsyncpa [#allocation10], 1
    %s1571 = scalar_lea.sflag [#allocation10], 1
    %1572 = vsyncpa %s1571, 1
    %1573 = vsyncpa [#allocation13], 1
    %1574 = vsyncpa [#allocation11], 1
    %s1575 = scalar_lea.sflag [#allocation11], 1
    %1576 = vsyncpa %s1575, 1

</llo_original>
